<compile_context>
chip_gen: v7x
topology: tpu7x:2x2x1
jax: 0.10.0
libtpu: 0.0.40
codegen_flags: <defaults>
</compile_context>

<pallas_src>
import functools
import math

import jax
import jax.numpy as jnp
from jax.experimental import pallas as pl
from jax.experimental.pallas import tpu as pltpu


_VMEM_LIMIT = 32 * 1024 * 1024  # above v5e's 16 MiB scoped default, safe on v7x


# ------------------------------------------------------------------ utilities
def _row_tiling(rows, block_rows):
    """Row-tile size; a single full-extent block is always legal."""
    if rows <= block_rows:
        return rows, 1, rows
    bm = block_rows
    n_tiles = pl.cdiv(rows, bm)
    return bm, n_tiles, n_tiles * bm


def _pad_rows(x, padded_rows):
    rows = x.shape[0]
    if padded_rows == rows:
        return x
    return jnp.pad(x, ((0, padded_rows - rows), (0, 0)))


def _layer_norm(x, gamma, beta, eps):
    """Matches the PyTorch module: a*(x-mean)/sqrt(std**2+eps)+b, unbiased std."""
    d = x.shape[-1]
    mean = jnp.mean(x, axis=-1, keepdims=True)
    xc = x - mean
    var = jnp.sum(xc * xc, axis=-1, keepdims=True) / (d - 1)
    return gamma * (xc * jax.lax.rsqrt(var + eps)) + beta


# -------------------------------------------------------------------- kernels
def _mha_sublayer_kernel(x_ref, mask_ref, g_ref, b_ref, wqkv_ref, bqkv_ref,
                         wo_ref, bo_ref, o_ref, *, n_heads, eps):
    """Fused sublayer 0: x + Wo(MHA(LayerNorm(x), mask)) for one batch element.

    x_ref: (S, D) f32; mask_ref: (1, S) f32 (1 = attend, 0 = masked key).
    wqkv/wo refs are bf16; qkv, scores and head outputs stay in VMEM/registers.
    """
    x = x_ref[...]                                          # (S, D) f32
    s_len, d = x.shape
    dk = d // n_heads
    scale = 1.0 / math.sqrt(dk)

    h = _layer_norm(x, g_ref[...], b_ref[...], eps)         # (S, D) f32

    qkv = jnp.dot(h.astype(jnp.bfloat16), wqkv_ref[...],
                  preferred_element_type=jnp.float32) + bqkv_ref[...]   # (S, 3D)

    kill = mask_ref[...] == 0.0                             # (1, S) key mask
    wo = wo_ref[...]                                        # (D, D) bf16, resident

    acc = x + bo_ref[...]                                   # residual + Wo bias
    # TODO(synk): for long sequences switch to flash-style K/V tiling with an
    #             online logsumexp instead of materialising (S, S) per head.
    for hd in range(n_heads):
        q_h = (qkv[:, hd * dk:(hd + 1) * dk] * scale).astype(jnp.bfloat16)
        k_h = qkv[:, d + hd * dk: d + (hd + 1) * dk].astype(jnp.bfloat16)
        v_h = qkv[:, 2 * d + hd * dk: 2 * d + (hd + 1) * dk].astype(jnp.bfloat16)

        s = jax.lax.dot_general(q_h, k_h, (((1,), (1,)), ((), ())),
                                preferred_element_type=jnp.float32)     # (S, S)
        s = jnp.where(kill, -1e9, s)                        # masked_fill(mask==0)
        m = jnp.max(s, axis=-1, keepdims=True)
        p = jnp.exp(s - m)
        l = jnp.sum(p, axis=-1, keepdims=True)
        p = p * pl.reciprocal(l, approx=True)

        attn_h = jnp.dot(p.astype(jnp.bfloat16), v_h,
                         preferred_element_type=jnp.float32)            # (S, dk)
        # accumulate this head's slice of the output projection
        acc = acc + jnp.dot(attn_h.astype(jnp.bfloat16),
                            wo[hd * dk:(hd + 1) * dk, :],
                            preferred_element_type=jnp.float32)
    o_ref[...] = acc.astype(o_ref.dtype)


def _ffn_sublayer_kernel(x_ref, g_ref, b_ref, w1_ref, b1_ref, w2_ref, b2_ref,
                         o_ref, *, eps):
    """Fused sublayer 1: x + W2(relu(W1(LayerNorm(x)))), (bm, d_ff) in VMEM."""
    x = x_ref[...]                                          # (bm, D) f32
    h = _layer_norm(x, g_ref[...], b_ref[...], eps)
    h1 = jnp.dot(h.astype(jnp.bfloat16), w1_ref[...],
                 preferred_element_type=jnp.float32) + b1_ref[...]
    h1 = jnp.maximum(h1, 0.0)
    out = jnp.dot(h1.astype(jnp.bfloat16), w2_ref[...],
                  preferred_element_type=jnp.float32) + b2_ref[...] + x
    o_ref[...] = out.astype(o_ref.dtype)


# ------------------------------------------------------------------- wrapper
@functools.partial(jax.jit, static_argnames=("n_heads", "block_rows"))
def encoder_layer_forward(x, mask, params, n_heads, block_rows=256):
    """Pre-norm Transformer encoder layer.  x: (B, S, D); mask: (B, 1, S)."""
    B, S, D = x.shape
    eps = 1e-6
    p = params
    d_ff = p["w_1"].shape[1]

    # bf16 matmul operands (cast once); LN params / biases / activations stay f32
    w_qkv = p["w_qkv"].astype(jnp.bfloat16)
    w_o = p["w_o"].astype(jnp.bfloat16)
    w_1 = p["w_1"].astype(jnp.bfloat16)
    w_2 = p["w_2"].astype(jnp.bfloat16)

    ln1_g = p["ln1_g"].reshape(1, D)
    ln1_b = p["ln1_b"].reshape(1, D)
    ln2_g = p["ln2_g"].reshape(1, D)
    ln2_b = p["ln2_b"].reshape(1, D)
    b_qkv = p["b_qkv"].reshape(1, 3 * D)
    b_o = p["b_o"].reshape(1, D)
    b_1 = p["b_1"].reshape(1, d_ff)
    b_2 = p["b_2"].reshape(1, D)

    maskf = mask.astype(jnp.float32)

    cparams = pltpu.CompilerParams(dimension_semantics=("parallel",),
                                   vmem_limit_bytes=_VMEM_LIMIT)

    # ---- sublayer 0: x + self_attn(LayerNorm(x), mask), one batch per step --
    x1 = pl.pallas_call(
        functools.partial(_mha_sublayer_kernel, n_heads=n_heads, eps=eps),
        out_shape=jax.ShapeDtypeStruct((B, S, D), x.dtype),
        grid_spec=pltpu.PrefetchScalarGridSpec(
            num_scalar_prefetch=0,
            grid=(B,),
            in_specs=[
                pl.BlockSpec((None, S, D), lambda b: (b, 0, 0)),     # x
                pl.BlockSpec((None, 1, S), lambda b: (b, 0, 0)),     # mask
                pl.BlockSpec((1, D), lambda b: (0, 0)),              # ln1 gamma
                pl.BlockSpec((1, D), lambda b: (0, 0)),              # ln1 beta
                pl.BlockSpec((D, 3 * D), lambda b: (0, 0)),          # w_qkv
                pl.BlockSpec((1, 3 * D), lambda b: (0, 0)),          # b_qkv
                pl.BlockSpec((D, D), lambda b: (0, 0)),              # w_o
                pl.BlockSpec((1, D), lambda b: (0, 0)),              # b_o
            ],
            out_specs=pl.BlockSpec((None, S, D), lambda b: (b, 0, 0))),
        compiler_params=cparams,
    )(x, maskf, ln1_g, ln1_b, w_qkv, b_qkv, w_o, b_o)

    # ---- sublayer 1: x + feed_forward(LayerNorm(x)), row-tiled over B*S -----
    rows = B * S
    bm, n_tiles, padded = _row_tiling(rows, block_rows)
    x2 = _pad_rows(x1.reshape(rows, D), padded)

    y = pl.pallas_call(
        functools.partial(_ffn_sublayer_kernel, eps=eps),
        out_shape=jax.ShapeDtypeStruct((padded, D), x.dtype),
        grid_spec=pltpu.PrefetchScalarGridSpec(
            num_scalar_prefetch=0,
            grid=(n_tiles,),
            in_specs=[
                pl.BlockSpec((bm, D), lambda i: (i, 0)),             # x tile
                pl.BlockSpec((1, D), lambda i: (0, 0)),              # ln2 gamma
                pl.BlockSpec((1, D), lambda i: (0, 0)),              # ln2 beta
                pl.BlockSpec((D, d_ff), lambda i: (0, 0)),           # w_1 (resident)
                pl.BlockSpec((1, d_ff), lambda i: (0, 0)),           # b_1
                pl.BlockSpec((d_ff, D), lambda i: (0, 0)),           # w_2 (resident)
                pl.BlockSpec((1, D), lambda i: (0, 0)),              # b_2
            ],
            out_specs=pl.BlockSpec((bm, D), lambda i: (i, 0))),
        compiler_params=cparams,
    )(x2, ln2_g, ln2_b, w_1, b_1, w_2, b_2)

    if padded != rows:
        y = y[:rows]
    return y.reshape(B, S, D)


# ------------------------------------------------------------------ reference
def _reference(x, mask, params, n_heads, eps=1e-6):
    def layer_norm(t, g, b):
        mean = t.mean(-1, keepdims=True)
        tc = t - mean
        var = (tc * tc).sum(-1, keepdims=True) / (t.shape[-1] - 1)
        return g * tc / jnp.sqrt(var + eps) + b

    B, S, D = x.shape
    dk = D // n_heads
    p = params

    h = layer_norm(x, p["ln1_g"], p["ln1_b"])
    qkv = h @ p["w_qkv"] + p["b_qkv"]
    q, k, v = jnp.split(qkv, 3, axis=-1)

    def heads(t):
        return t.reshape(B, S, n_heads, dk).transpose(0, 2, 1, 3)

    qh, kh, vh = heads(q), heads(k), heads(v)
    scores = jnp.einsum("bhqd,bhkd->bhqk", qh, kh) / math.sqrt(dk)
    scores = jnp.where(mask[:, :, None, :] == 0, -1e9, scores)
    probs = jax.nn.softmax(scores, axis=-1)
    attn = jnp.einsum("bhqk,bhkd->bhqd", probs, vh)
    attn = attn.transpose(0, 2, 1, 3).reshape(B, S, D)
    x = x + attn @ p["w_o"] + p["b_o"]

    h2 = layer_norm(x, p["ln2_g"], p["ln2_b"])
    ff = jnp.maximum(h2 @ p["w_1"] + p["b_1"], 0.0) @ p["w_2"] + p["b_2"]
    return x + ff


if __name__ == "__main__":
    # Small, lane-friendly shapes: d_model and d_ff are multiples of 128.
    batch, seq, d_model, n_heads, d_ff = 2, 16, 128, 4, 256

    key = jax.random.PRNGKey(0)
    keys = jax.random.split(key, 9)

    def linear_init(k, fan_in, shape):
        bound = 1.0 / math.sqrt(fan_in)
        return jax.random.uniform(k, shape, jnp.float32, -bound, bound)

    params = {
        "ln1_g": jnp.ones((d_model,), jnp.float32),
        "ln1_b": jnp.zeros((d_model,), jnp.float32),
        # fused Q/K/V projection, stored (in, out) = transpose of nn.Linear weight
        "w_qkv": linear_init(keys[1], d_model, (d_model, 3 * d_model)),
        "b_qkv": linear_init(keys[2], d_model, (3 * d_model,)),
        "w_o": linear_init(keys[3], d_model, (d_model, d_model)),
        "b_o": linear_init(keys[4], d_model, (d_model,)),
        "ln2_g": jnp.ones((d_model,), jnp.float32),
        "ln2_b": jnp.zeros((d_model,), jnp.float32),
        "w_1": linear_init(keys[5], d_model, (d_model, d_ff)),
        "b_1": linear_init(keys[6], d_model, (d_ff,)),
        "w_2": linear_init(keys[7], d_ff, (d_ff, d_model)),
        "b_2": linear_init(keys[8], d_ff, (d_model,)),
    }

    x = jax.random.normal(keys[0], (batch, seq, d_model), jnp.float32)
    # padding-style key mask: 1 = attend, 0 = masked (last 4 keys of batch 1)
    mask = jnp.ones((batch, 1, seq), jnp.float32).at[1, 0, -4:].set(0.0)

    y = encoder_layer_forward(x, mask, params, n_heads=n_heads)
    jax.block_until_ready(y)

    y_ref = _reference(x, mask, params, n_heads)
    assert y.shape == (batch, seq, d_model)
    # bf16 MXU operands with f32 accumulation -> loosened tolerance vs pure-f32 ref
    max_err = float(jnp.max(jnp.abs(y - y_ref)))
    assert jnp.allclose(y, y_ref, atol=5e-2, rtol=5e-2), max_err

    print("KERNEL_OK")
</pallas_src>

<mosaic_0001>
module attributes {stable_mosaic.version = 11 : i64} {
  func.func @_mha_sublayer_kernel(%arg0: i32, %arg1: memref<1x16x128xf32, #tpu.memory_space<vmem>>, %arg2: memref<1x1x16xf32, #tpu.memory_space<vmem>>, %arg3: memref<1x128xf32, #tpu.memory_space<vmem>>, %arg4: memref<1x128xf32, #tpu.memory_space<vmem>>, %arg5: memref<128x384xbf16, #tpu.memory_space<vmem>>, %arg6: memref<1x384xf32, #tpu.memory_space<vmem>>, %arg7: memref<128x128xbf16, #tpu.memory_space<vmem>>, %arg8: memref<1x128xf32, #tpu.memory_space<vmem>>, %arg9: memref<1x16x128xf32, #tpu.memory_space<vmem>>) attributes {dimension_semantics = [#tpu.dimension_semantics<parallel>], iteration_bounds = array<i64: 2>, scalar_prefetch = 0 : i64, scratch_operands = 0 : i64, tpu.core_type = #tpu.core_type<tc>, window_params = [{transform_indices = @transform_0, window_bounds = array<i64: 1, 16, 128>}, {transform_indices = @transform_1, window_bounds = array<i64: 1, 1, 16>}, {pipeline_mode = #tpu.pipeline_mode<synchronous>, transform_indices = @transform_2, window_bounds = array<i64: 1, 128>}, {pipeline_mode = #tpu.pipeline_mode<synchronous>, transform_indices = @transform_3, window_bounds = array<i64: 1, 128>}, {pipeline_mode = #tpu.pipeline_mode<synchronous>, transform_indices = @transform_4, window_bounds = array<i64: 128, 384>}, {pipeline_mode = #tpu.pipeline_mode<synchronous>, transform_indices = @transform_5, window_bounds = array<i64: 1, 384>}, {pipeline_mode = #tpu.pipeline_mode<synchronous>, transform_indices = @transform_6, window_bounds = array<i64: 128, 128>}, {pipeline_mode = #tpu.pipeline_mode<synchronous>, transform_indices = @transform_7, window_bounds = array<i64: 1, 128>}, {transform_indices = @transform_8, window_bounds = array<i64: 1, 16, 128>}]} {
    %c0 = arith.constant 0 : index
    %c0_0 = arith.constant 0 : index
    %c0_1 = arith.constant 0 : index
    %0 = vector.load %arg1[%c0, %c0_0, %c0_1] : memref<1x16x128xf32, #tpu.memory_space<vmem>>, vector<1x16x128xf32>
    %1 = vector.shape_cast %0 : vector<1x16x128xf32> to vector<16x128xf32>
    %c0_2 = arith.constant 0 : index
    %c0_3 = arith.constant 0 : index
    %2 = vector.load %arg3[%c0_2, %c0_3] : memref<1x128xf32, #tpu.memory_space<vmem>>, vector<1x128xf32>
    %c0_4 = arith.constant 0 : index
    %c0_5 = arith.constant 0 : index
    %3 = vector.load %arg4[%c0_4, %c0_5] : memref<1x128xf32, #tpu.memory_space<vmem>>, vector<1x128xf32>
    %cst = arith.constant dense<0.000000e+00> : vector<16xf32>
    %4 = vector.multi_reduction <add>, %1, %cst [1] : vector<16x128xf32> to vector<16xf32>
    %5 = vector.shape_cast %4 : vector<16xf32> to vector<16x1xf32>
    %cst_6 = arith.constant 1.280000e+02 : f32
    %6 = vector.broadcast %cst_6 : f32 to vector<16x1xf32>
    %7 = arith.divf %5, %6 : vector<16x1xf32>
    %8 = vector.broadcast %7 : vector<16x1xf32> to vector<16x128xf32>
    %9 = arith.subf %1, %8 : vector<16x128xf32>
    %10 = arith.mulf %9, %9 : vector<16x128xf32>
    %cst_7 = arith.constant dense<0.000000e+00> : vector<16xf32>
    %11 = vector.multi_reduction <add>, %10, %cst_7 [1] : vector<16x128xf32> to vector<16xf32>
    %12 = vector.shape_cast %11 : vector<16xf32> to vector<16x1xf32>
    %cst_8 = arith.constant 1.270000e+02 : f32
    %13 = vector.broadcast %cst_8 : f32 to vector<16x1xf32>
    %14 = arith.divf %12, %13 : vector<16x1xf32>
    %cst_9 = arith.constant 9.99999997E-7 : f32
    %15 = vector.broadcast %cst_9 : f32 to vector<16x1xf32>
    %16 = arith.addf %14, %15 : vector<16x1xf32>
    %17 = math.rsqrt %16 : vector<16x1xf32>
    %18 = vector.broadcast %17 : vector<16x1xf32> to vector<16x128xf32>
    %19 = arith.mulf %9, %18 : vector<16x128xf32>
    %20 = vector.broadcast %2 : vector<1x128xf32> to vector<16x128xf32>
    %21 = arith.mulf %20, %19 : vector<16x128xf32>
    %22 = vector.broadcast %3 : vector<1x128xf32> to vector<16x128xf32>
    %23 = arith.addf %21, %22 : vector<16x128xf32>
    %24 = arith.truncf %23 : vector<16x128xf32> to vector<16x128xbf16>
    %c0_10 = arith.constant 0 : index
    %c0_11 = arith.constant 0 : index
    %25 = vector.load %arg5[%c0_10, %c0_11] : memref<128x384xbf16, #tpu.memory_space<vmem>>, vector<128x384xbf16>
    %cst_12 = arith.constant dense<0.000000e+00> : vector<16x384xf32>
    %26 = tpu.matmul %24, %25, %cst_12 {dimension_numbers = #tpu.dot_dimension_numbers<[1], [0], [0], [1], [0, 0, 1, 1], [], []>} : vector<16x128xbf16>, vector<128x384xbf16>, vector<16x384xf32> -> vector<16x384xf32>
    %c0_13 = arith.constant 0 : index
    %c0_14 = arith.constant 0 : index
    %27 = vector.load %arg6[%c0_13, %c0_14] : memref<1x384xf32, #tpu.memory_space<vmem>>, vector<1x384xf32>
    %28 = vector.broadcast %27 : vector<1x384xf32> to vector<16x384xf32>
    %29 = arith.addf %26, %28 : vector<16x384xf32>
    %c0_15 = arith.constant 0 : index
    %c0_16 = arith.constant 0 : index
    %c0_17 = arith.constant 0 : index
    %30 = vector.load %arg2[%c0_15, %c0_16, %c0_17] : memref<1x1x16xf32, #tpu.memory_space<vmem>>, vector<1x1x16xf32>
    %31 = vector.shape_cast %30 : vector<1x1x16xf32> to vector<1x16xf32>
    %cst_18 = arith.constant 0.000000e+00 : f32
    %32 = vector.broadcast %cst_18 : f32 to vector<1x16xf32>
    %33 = arith.cmpf oeq, %31, %32 : vector<1x16xf32>
    %c0_19 = arith.constant 0 : index
    %c0_20 = arith.constant 0 : index
    %34 = vector.load %arg7[%c0_19, %c0_20] : memref<128x128xbf16, #tpu.memory_space<vmem>>, vector<128x128xbf16>
    %c0_21 = arith.constant 0 : index
    %c0_22 = arith.constant 0 : index
    %35 = vector.load %arg8[%c0_21, %c0_22] : memref<1x128xf32, #tpu.memory_space<vmem>>, vector<1x128xf32>
    %36 = vector.broadcast %35 : vector<1x128xf32> to vector<16x128xf32>
    %37 = arith.addf %1, %36 : vector<16x128xf32>
    %38 = vector.extract_strided_slice %29 {offsets = [0, 0], sizes = [16, 32], strides = [1, 1]} : vector<16x384xf32> to vector<16x32xf32>
    %cst_23 = arith.constant 0.176776692 : f32
    %39 = vector.broadcast %cst_23 : f32 to vector<16x32xf32>
    %40 = arith.mulf %38, %39 : vector<16x32xf32>
    %41 = arith.truncf %40 : vector<16x32xf32> to vector<16x32xbf16>
    %42 = vector.extract_strided_slice %29 {offsets = [0, 128], sizes = [16, 32], strides = [1, 1]} : vector<16x384xf32> to vector<16x32xf32>
    %43 = arith.truncf %42 : vector<16x32xf32> to vector<16x32xbf16>
    %44 = vector.extract_strided_slice %29 {offsets = [0, 256], sizes = [16, 32], strides = [1, 1]} : vector<16x384xf32> to vector<16x32xf32>
    %45 = arith.truncf %44 : vector<16x32xf32> to vector<16x32xbf16>
    %cst_24 = arith.constant dense<0.000000e+00> : vector<16x16xf32>
    %46 = tpu.matmul %41, %43, %cst_24 {dimension_numbers = #tpu.dot_dimension_numbers<[1], [1], [0], [0], [0, 0, 1, 0], [], []>} : vector<16x32xbf16>, vector<16x32xbf16>, vector<16x16xf32> -> vector<16x16xf32>
    %cst_25 = arith.constant -1.000000e+09 : f32
    %47 = vector.shape_cast %33 : vector<1x16xi1> to vector<1x16xi1>
    %48 = vector.broadcast %47 : vector<1x16xi1> to vector<16x16xi1>
    %49 = vector.broadcast %cst_25 : f32 to vector<16x16xf32>
    %50 = arith.select %48, %49, %46 : vector<16x16xi1>, vector<16x16xf32>
    %cst_26 = arith.constant dense<0xFF800000> : vector<16xf32>
    %51 = vector.multi_reduction <maximumf>, %50, %cst_26 [1] : vector<16x16xf32> to vector<16xf32>
    %52 = vector.shape_cast %51 : vector<16xf32> to vector<16x1xf32>
    %53 = vector.broadcast %52 : vector<16x1xf32> to vector<16x16xf32>
    %54 = arith.subf %50, %53 : vector<16x16xf32>
    %55 = math.exp %54 : vector<16x16xf32>
    %cst_27 = arith.constant dense<0.000000e+00> : vector<16xf32>
    %56 = vector.multi_reduction <add>, %55, %cst_27 [1] : vector<16x16xf32> to vector<16xf32>
    %57 = vector.shape_cast %56 : vector<16xf32> to vector<16x1xf32>
    %58 = tpu.reciprocal %57 {approx = true} : vector<16x1xf32> -> vector<16x1xf32>
    %59 = vector.broadcast %58 : vector<16x1xf32> to vector<16x16xf32>
    %60 = arith.mulf %55, %59 : vector<16x16xf32>
    %61 = arith.truncf %60 : vector<16x16xf32> to vector<16x16xbf16>
    %cst_28 = arith.constant dense<0.000000e+00> : vector<16x32xf32>
    %62 = tpu.matmul %61, %45, %cst_28 {dimension_numbers = #tpu.dot_dimension_numbers<[1], [0], [0], [1], [0, 0, 1, 1], [], []>} : vector<16x16xbf16>, vector<16x32xbf16>, vector<16x32xf32> -> vector<16x32xf32>
    %63 = arith.truncf %62 : vector<16x32xf32> to vector<16x32xbf16>
    %64 = vector.extract_strided_slice %34 {offsets = [0, 0], sizes = [32, 128], strides = [1, 1]} : vector<128x128xbf16> to vector<32x128xbf16>
    %cst_29 = arith.constant dense<0.000000e+00> : vector<16x128xf32>
    %65 = tpu.matmul %63, %64, %cst_29 {dimension_numbers = #tpu.dot_dimension_numbers<[1], [0], [0], [1], [0, 0, 1, 1], [], []>} : vector<16x32xbf16>, vector<32x128xbf16>, vector<16x128xf32> -> vector<16x128xf32>
    %66 = arith.addf %37, %65 : vector<16x128xf32>
    %67 = vector.extract_strided_slice %29 {offsets = [0, 32], sizes = [16, 32], strides = [1, 1]} : vector<16x384xf32> to vector<16x32xf32>
    %cst_30 = arith.constant 0.176776692 : f32
    %68 = vector.broadcast %cst_30 : f32 to vector<16x32xf32>
    %69 = arith.mulf %67, %68 : vector<16x32xf32>
    %70 = arith.truncf %69 : vector<16x32xf32> to vector<16x32xbf16>
    %71 = vector.extract_strided_slice %29 {offsets = [0, 160], sizes = [16, 32], strides = [1, 1]} : vector<16x384xf32> to vector<16x32xf32>
    %72 = arith.truncf %71 : vector<16x32xf32> to vector<16x32xbf16>
    %73 = vector.extract_strided_slice %29 {offsets = [0, 288], sizes = [16, 32], strides = [1, 1]} : vector<16x384xf32> to vector<16x32xf32>
    %74 = arith.truncf %73 : vector<16x32xf32> to vector<16x32xbf16>
    %cst_31 = arith.constant dense<0.000000e+00> : vector<16x16xf32>
    %75 = tpu.matmul %70, %72, %cst_31 {dimension_numbers = #tpu.dot_dimension_numbers<[1], [1], [0], [0], [0, 0, 1, 0], [], []>} : vector<16x32xbf16>, vector<16x32xbf16>, vector<16x16xf32> -> vector<16x16xf32>
    %cst_32 = arith.constant -1.000000e+09 : f32
    %76 = vector.shape_cast %33 : vector<1x16xi1> to vector<1x16xi1>
    %77 = vector.broadcast %76 : vector<1x16xi1> to vector<16x16xi1>
    %78 = vector.broadcast %cst_32 : f32 to vector<16x16xf32>
    %79 = arith.select %77, %78, %75 : vector<16x16xi1>, vector<16x16xf32>
    %cst_33 = arith.constant dense<0xFF800000> : vector<16xf32>
    %80 = vector.multi_reduction <maximumf>, %79, %cst_33 [1] : vector<16x16xf32> to vector<16xf32>
    %81 = vector.shape_cast %80 : vector<16xf32> to vector<16x1xf32>
    %82 = vector.broadcast %81 : vector<16x1xf32> to vector<16x16xf32>
    %83 = arith.subf %79, %82 : vector<16x16xf32>
    %84 = math.exp %83 : vector<16x16xf32>
    %cst_34 = arith.constant dense<0.000000e+00> : vector<16xf32>
    %85 = vector.multi_reduction <add>, %84, %cst_34 [1] : vector<16x16xf32> to vector<16xf32>
    %86 = vector.shape_cast %85 : vector<16xf32> to vector<16x1xf32>
    %87 = tpu.reciprocal %86 {approx = true} : vector<16x1xf32> -> vector<16x1xf32>
    %88 = vector.broadcast %87 : vector<16x1xf32> to vector<16x16xf32>
    %89 = arith.mulf %84, %88 : vector<16x16xf32>
    %90 = arith.truncf %89 : vector<16x16xf32> to vector<16x16xbf16>
    %cst_35 = arith.constant dense<0.000000e+00> : vector<16x32xf32>
    %91 = tpu.matmul %90, %74, %cst_35 {dimension_numbers = #tpu.dot_dimension_numbers<[1], [0], [0], [1], [0, 0, 1, 1], [], []>} : vector<16x16xbf16>, vector<16x32xbf16>, vector<16x32xf32> -> vector<16x32xf32>
    %92 = arith.truncf %91 : vector<16x32xf32> to vector<16x32xbf16>
    %93 = vector.extract_strided_slice %34 {offsets = [32, 0], sizes = [32, 128], strides = [1, 1]} : vector<128x128xbf16> to vector<32x128xbf16>
    %cst_36 = arith.constant dense<0.000000e+00> : vector<16x128xf32>
    %94 = tpu.matmul %92, %93, %cst_36 {dimension_numbers = #tpu.dot_dimension_numbers<[1], [0], [0], [1], [0, 0, 1, 1], [], []>} : vector<16x32xbf16>, vector<32x128xbf16>, vector<16x128xf32> -> vector<16x128xf32>
    %95 = arith.addf %66, %94 : vector<16x128xf32>
    %96 = vector.extract_strided_slice %29 {offsets = [0, 64], sizes = [16, 32], strides = [1, 1]} : vector<16x384xf32> to vector<16x32xf32>
    %cst_37 = arith.constant 0.176776692 : f32
    %97 = vector.broadcast %cst_37 : f32 to vector<16x32xf32>
    %98 = arith.mulf %96, %97 : vector<16x32xf32>
    %99 = arith.truncf %98 : vector<16x32xf32> to vector<16x32xbf16>
    %100 = vector.extract_strided_slice %29 {offsets = [0, 192], sizes = [16, 32], strides = [1, 1]} : vector<16x384xf32> to vector<16x32xf32>
    %101 = arith.truncf %100 : vector<16x32xf32> to vector<16x32xbf16>
    %102 = vector.extract_strided_slice %29 {offsets = [0, 320], sizes = [16, 32], strides = [1, 1]} : vector<16x384xf32> to vector<16x32xf32>
    %103 = arith.truncf %102 : vector<16x32xf32> to vector<16x32xbf16>
    %cst_38 = arith.constant dense<0.000000e+00> : vector<16x16xf32>
    %104 = tpu.matmul %99, %101, %cst_38 {dimension_numbers = #tpu.dot_dimension_numbers<[1], [1], [0], [0], [0, 0, 1, 0], [], []>} : vector<16x32xbf16>, vector<16x32xbf16>, vector<16x16xf32> -> vector<16x16xf32>
    %cst_39 = arith.constant -1.000000e+09 : f32
    %105 = vector.shape_cast %33 : vector<1x16xi1> to vector<1x16xi1>
    %106 = vector.broadcast %105 : vector<1x16xi1> to vector<16x16xi1>
    %107 = vector.broadcast %cst_39 : f32 to vector<16x16xf32>
    %108 = arith.select %106, %107, %104 : vector<16x16xi1>, vector<16x16xf32>
    %cst_40 = arith.constant dense<0xFF800000> : vector<16xf32>
    %109 = vector.multi_reduction <maximumf>, %108, %cst_40 [1] : vector<16x16xf32> to vector<16xf32>
    %110 = vector.shape_cast %109 : vector<16xf32> to vector<16x1xf32>
    %111 = vector.broadcast %110 : vector<16x1xf32> to vector<16x16xf32>
    %112 = arith.subf %108, %111 : vector<16x16xf32>
    %113 = math.exp %112 : vector<16x16xf32>
    %cst_41 = arith.constant dense<0.000000e+00> : vector<16xf32>
    %114 = vector.multi_reduction <add>, %113, %cst_41 [1] : vector<16x16xf32> to vector<16xf32>
    %115 = vector.shape_cast %114 : vector<16xf32> to vector<16x1xf32>
    %116 = tpu.reciprocal %115 {approx = true} : vector<16x1xf32> -> vector<16x1xf32>
    %117 = vector.broadcast %116 : vector<16x1xf32> to vector<16x16xf32>
    %118 = arith.mulf %113, %117 : vector<16x16xf32>
    %119 = arith.truncf %118 : vector<16x16xf32> to vector<16x16xbf16>
    %cst_42 = arith.constant dense<0.000000e+00> : vector<16x32xf32>
    %120 = tpu.matmul %119, %103, %cst_42 {dimension_numbers = #tpu.dot_dimension_numbers<[1], [0], [0], [1], [0, 0, 1, 1], [], []>} : vector<16x16xbf16>, vector<16x32xbf16>, vector<16x32xf32> -> vector<16x32xf32>
    %121 = arith.truncf %120 : vector<16x32xf32> to vector<16x32xbf16>
    %122 = vector.extract_strided_slice %34 {offsets = [64, 0], sizes = [32, 128], strides = [1, 1]} : vector<128x128xbf16> to vector<32x128xbf16>
    %cst_43 = arith.constant dense<0.000000e+00> : vector<16x128xf32>
    %123 = tpu.matmul %121, %122, %cst_43 {dimension_numbers = #tpu.dot_dimension_numbers<[1], [0], [0], [1], [0, 0, 1, 1], [], []>} : vector<16x32xbf16>, vector<32x128xbf16>, vector<16x128xf32> -> vector<16x128xf32>
    %124 = arith.addf %95, %123 : vector<16x128xf32>
    %125 = vector.extract_strided_slice %29 {offsets = [0, 96], sizes = [16, 32], strides = [1, 1]} : vector<16x384xf32> to vector<16x32xf32>
    %cst_44 = arith.constant 0.176776692 : f32
    %126 = vector.broadcast %cst_44 : f32 to vector<16x32xf32>
    %127 = arith.mulf %125, %126 : vector<16x32xf32>
    %128 = arith.truncf %127 : vector<16x32xf32> to vector<16x32xbf16>
    %129 = vector.extract_strided_slice %29 {offsets = [0, 224], sizes = [16, 32], strides = [1, 1]} : vector<16x384xf32> to vector<16x32xf32>
    %130 = arith.truncf %129 : vector<16x32xf32> to vector<16x32xbf16>
    %131 = vector.extract_strided_slice %29 {offsets = [0, 352], sizes = [16, 32], strides = [1, 1]} : vector<16x384xf32> to vector<16x32xf32>
    %132 = arith.truncf %131 : vector<16x32xf32> to vector<16x32xbf16>
    %cst_45 = arith.constant dense<0.000000e+00> : vector<16x16xf32>
    %133 = tpu.matmul %128, %130, %cst_45 {dimension_numbers = #tpu.dot_dimension_numbers<[1], [1], [0], [0], [0, 0, 1, 0], [], []>} : vector<16x32xbf16>, vector<16x32xbf16>, vector<16x16xf32> -> vector<16x16xf32>
    %cst_46 = arith.constant -1.000000e+09 : f32
    %134 = vector.shape_cast %33 : vector<1x16xi1> to vector<1x16xi1>
    %135 = vector.broadcast %134 : vector<1x16xi1> to vector<16x16xi1>
    %136 = vector.broadcast %cst_46 : f32 to vector<16x16xf32>
    %137 = arith.select %135, %136, %133 : vector<16x16xi1>, vector<16x16xf32>
    %cst_47 = arith.constant dense<0xFF800000> : vector<16xf32>
    %138 = vector.multi_reduction <maximumf>, %137, %cst_47 [1] : vector<16x16xf32> to vector<16xf32>
    %139 = vector.shape_cast %138 : vector<16xf32> to vector<16x1xf32>
    %140 = vector.broadcast %139 : vector<16x1xf32> to vector<16x16xf32>
    %141 = arith.subf %137, %140 : vector<16x16xf32>
    %142 = math.exp %141 : vector<16x16xf32>
    %cst_48 = arith.constant dense<0.000000e+00> : vector<16xf32>
    %143 = vector.multi_reduction <add>, %142, %cst_48 [1] : vector<16x16xf32> to vector<16xf32>
    %144 = vector.shape_cast %143 : vector<16xf32> to vector<16x1xf32>
    %145 = tpu.reciprocal %144 {approx = true} : vector<16x1xf32> -> vector<16x1xf32>
    %146 = vector.broadcast %145 : vector<16x1xf32> to vector<16x16xf32>
    %147 = arith.mulf %142, %146 : vector<16x16xf32>
    %148 = arith.truncf %147 : vector<16x16xf32> to vector<16x16xbf16>
    %cst_49 = arith.constant dense<0.000000e+00> : vector<16x32xf32>
    %149 = tpu.matmul %148, %132, %cst_49 {dimension_numbers = #tpu.dot_dimension_numbers<[1], [0], [0], [1], [0, 0, 1, 1], [], []>} : vector<16x16xbf16>, vector<16x32xbf16>, vector<16x32xf32> -> vector<16x32xf32>
    %150 = arith.truncf %149 : vector<16x32xf32> to vector<16x32xbf16>
    %151 = vector.extract_strided_slice %34 {offsets = [96, 0], sizes = [32, 128], strides = [1, 1]} : vector<128x128xbf16> to vector<32x128xbf16>
    %cst_50 = arith.constant dense<0.000000e+00> : vector<16x128xf32>
    %152 = tpu.matmul %150, %151, %cst_50 {dimension_numbers = #tpu.dot_dimension_numbers<[1], [0], [0], [1], [0, 0, 1, 1], [], []>} : vector<16x32xbf16>, vector<32x128xbf16>, vector<16x128xf32> -> vector<16x128xf32>
    %153 = arith.addf %124, %152 : vector<16x128xf32>
    %c0_51 = arith.constant 0 : index
    %c0_52 = arith.constant 0 : index
    %c0_53 = arith.constant 0 : index
    %154 = vector.load %arg9[%c0_51, %c0_52, %c0_53] : memref<1x16x128xf32, #tpu.memory_space<vmem>>, vector<1x16x128xf32>
    %155 = vector.shape_cast %154 : vector<1x16x128xf32> to vector<16x128xf32>
    %156 = vector.shape_cast %153 : vector<16x128xf32> to vector<1x16x128xf32>
    tpu.vector_store %arg9[%c0_51, %c0_52, %c0_53], %156 {strides = array<i32>} : memref<1x16x128xf32, #tpu.memory_space<vmem>>, vector<1x16x128xf32>,
    return
  }
  func.func @transform_0(%arg0: i32) -> (i32, i32, i32) {
    %c0_i32 = arith.constant 0 : i32
    %c0_i32_0 = arith.constant 0 : i32
    %c0_i32_1 = arith.constant 0 : i32
    return %arg0, %c0_i32, %c0_i32_0 : i32, i32, i32
  }
  func.func @transform_1(%arg0: i32) -> (i32, i32, i32) {
    %c0_i32 = arith.constant 0 : i32
    %c0_i32_0 = arith.constant 0 : i32
    %c0_i32_1 = arith.constant 0 : i32
    return %arg0, %c0_i32, %c0_i32_0 : i32, i32, i32
  }
  func.func @transform_2(%arg0: i32) -> (i32, i32) {
    %c0_i32 = arith.constant 0 : i32
    %c0_i32_0 = arith.constant 0 : i32
    %c0_i32_1 = arith.constant 0 : i32
    return %c0_i32, %c0_i32_0 : i32, i32
  }
  func.func @transform_3(%arg0: i32) -> (i32, i32) {
    %c0_i32 = arith.constant 0 : i32
    %c0_i32_0 = arith.constant 0 : i32
    %c0_i32_1 = arith.constant 0 : i32
    return %c0_i32, %c0_i32_0 : i32, i32
  }
  func.func @transform_4(%arg0: i32) -> (i32, i32) {
    %c0_i32 = arith.constant 0 : i32
    %c0_i32_0 = arith.constant 0 : i32
    %c0_i32_1 = arith.constant 0 : i32
    return %c0_i32, %c0_i32_0 : i32, i32
  }
  func.func @transform_5(%arg0: i32) -> (i32, i32) {
    %c0_i32 = arith.constant 0 : i32
    %c0_i32_0 = arith.constant 0 : i32
    %c0_i32_1 = arith.constant 0 : i32
    return %c0_i32, %c0_i32_0 : i32, i32
  }
  func.func @transform_6(%arg0: i32) -> (i32, i32) {
    %c0_i32 = arith.constant 0 : i32
    %c0_i32_0 = arith.constant 0 : i32
    %c0_i32_1 = arith.constant 0 : i32
    return %c0_i32, %c0_i32_0 : i32, i32
  }
  func.func @transform_7(%arg0: i32) -> (i32, i32) {
    %c0_i32 = arith.constant 0 : i32
    %c0_i32_0 = arith.constant 0 : i32
    %c0_i32_1 = arith.constant 0 : i32
    return %c0_i32, %c0_i32_0 : i32, i32
  }
  func.func @transform_8(%arg0: i32) -> (i32, i32, i32) {
    %c0_i32 = arith.constant 0 : i32
    %c0_i32_0 = arith.constant 0 : i32
    %c0_i32_1 = arith.constant 0 : i32
    return %arg0, %c0_i32, %c0_i32_0 : i32, i32, i32
  }
}

module attributes {stable_mosaic.version = 11 : i64} {
  func.func @_ffn_sublayer_kernel(%arg0: i32, %arg1: memref<32x128xf32, #tpu.memory_space<vmem>>, %arg2: memref<1x128xf32, #tpu.memory_space<vmem>>, %arg3: memref<1x128xf32, #tpu.memory_space<vmem>>, %arg4: memref<128x256xbf16, #tpu.memory_space<vmem>>, %arg5: memref<1x256xf32, #tpu.memory_space<vmem>>, %arg6: memref<256x128xbf16, #tpu.memory_space<vmem>>, %arg7: memref<1x128xf32, #tpu.memory_space<vmem>>, %arg8: memref<32x128xf32, #tpu.memory_space<vmem>>) attributes {dimension_semantics = [#tpu.dimension_semantics<parallel>], iteration_bounds = array<i64: 1>, scalar_prefetch = 0 : i64, scratch_operands = 0 : i64, tpu.core_type = #tpu.core_type<tc>, window_params = [{transform_indices = @transform_0, window_bounds = array<i64: 32, 128>}, {pipeline_mode = #tpu.pipeline_mode<synchronous>, transform_indices = @transform_1, window_bounds = array<i64: 1, 128>}, {pipeline_mode = #tpu.pipeline_mode<synchronous>, transform_indices = @transform_2, window_bounds = array<i64: 1, 128>}, {pipeline_mode = #tpu.pipeline_mode<synchronous>, transform_indices = @transform_3, window_bounds = array<i64: 128, 256>}, {pipeline_mode = #tpu.pipeline_mode<synchronous>, transform_indices = @transform_4, window_bounds = array<i64: 1, 256>}, {pipeline_mode = #tpu.pipeline_mode<synchronous>, transform_indices = @transform_5, window_bounds = array<i64: 256, 128>}, {pipeline_mode = #tpu.pipeline_mode<synchronous>, transform_indices = @transform_6, window_bounds = array<i64: 1, 128>}, {transform_indices = @transform_7, window_bounds = array<i64: 32, 128>}]} {
    %c0 = arith.constant 0 : index
    %c0_0 = arith.constant 0 : index
    %0 = vector.load %arg1[%c0, %c0_0] : memref<32x128xf32, #tpu.memory_space<vmem>>, vector<32x128xf32>
    %c0_1 = arith.constant 0 : index
    %c0_2 = arith.constant 0 : index
    %1 = vector.load %arg2[%c0_1, %c0_2] : memref<1x128xf32, #tpu.memory_space<vmem>>, vector<1x128xf32>
    %c0_3 = arith.constant 0 : index
    %c0_4 = arith.constant 0 : index
    %2 = vector.load %arg3[%c0_3, %c0_4] : memref<1x128xf32, #tpu.memory_space<vmem>>, vector<1x128xf32>
    %cst = arith.constant dense<0.000000e+00> : vector<32xf32>
    %3 = vector.multi_reduction <add>, %0, %cst [1] : vector<32x128xf32> to vector<32xf32>
    %4 = vector.shape_cast %3 : vector<32xf32> to vector<32x1xf32>
    %cst_5 = arith.constant 1.280000e+02 : f32
    %5 = vector.broadcast %cst_5 : f32 to vector<32x1xf32>
    %6 = arith.divf %4, %5 : vector<32x1xf32>
    %7 = vector.broadcast %6 : vector<32x1xf32> to vector<32x128xf32>
    %8 = arith.subf %0, %7 : vector<32x128xf32>
    %9 = arith.mulf %8, %8 : vector<32x128xf32>
    %cst_6 = arith.constant dense<0.000000e+00> : vector<32xf32>
    %10 = vector.multi_reduction <add>, %9, %cst_6 [1] : vector<32x128xf32> to vector<32xf32>
    %11 = vector.shape_cast %10 : vector<32xf32> to vector<32x1xf32>
    %cst_7 = arith.constant 1.270000e+02 : f32
    %12 = vector.broadcast %cst_7 : f32 to vector<32x1xf32>
    %13 = arith.divf %11, %12 : vector<32x1xf32>
    %cst_8 = arith.constant 9.99999997E-7 : f32
    %14 = vector.broadcast %cst_8 : f32 to vector<32x1xf32>
    %15 = arith.addf %13, %14 : vector<32x1xf32>
    %16 = math.rsqrt %15 : vector<32x1xf32>
    %17 = vector.broadcast %16 : vector<32x1xf32> to vector<32x128xf32>
    %18 = arith.mulf %8, %17 : vector<32x128xf32>
    %19 = vector.broadcast %1 : vector<1x128xf32> to vector<32x128xf32>
    %20 = arith.mulf %19, %18 : vector<32x128xf32>
    %21 = vector.broadcast %2 : vector<1x128xf32> to vector<32x128xf32>
    %22 = arith.addf %20, %21 : vector<32x128xf32>
    %23 = arith.truncf %22 : vector<32x128xf32> to vector<32x128xbf16>
    %c0_9 = arith.constant 0 : index
    %c0_10 = arith.constant 0 : index
    %24 = vector.load %arg4[%c0_9, %c0_10] : memref<128x256xbf16, #tpu.memory_space<vmem>>, vector<128x256xbf16>
    %cst_11 = arith.constant dense<0.000000e+00> : vector<32x256xf32>
    %25 = tpu.matmul %23, %24, %cst_11 {dimension_numbers = #tpu.dot_dimension_numbers<[1], [0], [0], [1], [0, 0, 1, 1], [], []>} : vector<32x128xbf16>, vector<128x256xbf16>, vector<32x256xf32> -> vector<32x256xf32>
    %c0_12 = arith.constant 0 : index
    %c0_13 = arith.constant 0 : index
    %26 = vector.load %arg5[%c0_12, %c0_13] : memref<1x256xf32, #tpu.memory_space<vmem>>, vector<1x256xf32>
    %27 = vector.broadcast %26 : vector<1x256xf32> to vector<32x256xf32>
    %28 = arith.addf %25, %27 : vector<32x256xf32>
    %cst_14 = arith.constant 0.000000e+00 : f32
    %29 = vector.broadcast %cst_14 : f32 to vector<32x256xf32>
    %30 = arith.maximumf %28, %29 : vector<32x256xf32>
    %31 = arith.truncf %30 : vector<32x256xf32> to vector<32x256xbf16>
    %c0_15 = arith.constant 0 : index
    %c0_16 = arith.constant 0 : index
    %32 = vector.load %arg6[%c0_15, %c0_16] : memref<256x128xbf16, #tpu.memory_space<vmem>>, vector<256x128xbf16>
    %cst_17 = arith.constant dense<0.000000e+00> : vector<32x128xf32>
    %33 = tpu.matmul %31, %32, %cst_17 {dimension_numbers = #tpu.dot_dimension_numbers<[1], [0], [0], [1], [0, 0, 1, 1], [], []>} : vector<32x256xbf16>, vector<256x128xbf16>, vector<32x128xf32> -> vector<32x128xf32>
    %c0_18 = arith.constant 0 : index
    %c0_19 = arith.constant 0 : index
    %34 = vector.load %arg7[%c0_18, %c0_19] : memref<1x128xf32, #tpu.memory_space<vmem>>, vector<1x128xf32>
    %35 = vector.broadcast %34 : vector<1x128xf32> to vector<32x128xf32>
    %36 = arith.addf %33, %35 : vector<32x128xf32>
    %37 = arith.addf %36, %0 : vector<32x128xf32>
    %c0_20 = arith.constant 0 : index
    %c0_21 = arith.constant 0 : index
    %38 = vector.load %arg8[%c0_20, %c0_21] : memref<32x128xf32, #tpu.memory_space<vmem>>, vector<32x128xf32>
    tpu.vector_store %arg8[%c0_20, %c0_21], %37 {strides = array<i32>} : memref<32x128xf32, #tpu.memory_space<vmem>>, vector<32x128xf32>,
    return
  }
  func.func @transform_0(%arg0: i32) -> (i32, i32) {
    %c0_i32 = arith.constant 0 : i32
    %c0_i32_0 = arith.constant 0 : i32
    return %arg0, %c0_i32 : i32, i32
  }
  func.func @transform_1(%arg0: i32) -> (i32, i32) {
    %c0_i32 = arith.constant 0 : i32
    %c0_i32_0 = arith.constant 0 : i32
    %c0_i32_1 = arith.constant 0 : i32
    return %c0_i32, %c0_i32_0 : i32, i32
  }
  func.func @transform_2(%arg0: i32) -> (i32, i32) {
    %c0_i32 = arith.constant 0 : i32
    %c0_i32_0 = arith.constant 0 : i32
    %c0_i32_1 = arith.constant 0 : i32
    return %c0_i32, %c0_i32_0 : i32, i32
  }
  func.func @transform_3(%arg0: i32) -> (i32, i32) {
    %c0_i32 = arith.constant 0 : i32
    %c0_i32_0 = arith.constant 0 : i32
    %c0_i32_1 = arith.constant 0 : i32
    return %c0_i32, %c0_i32_0 : i32, i32
  }
  func.func @transform_4(%arg0: i32) -> (i32, i32) {
    %c0_i32 = arith.constant 0 : i32
    %c0_i32_0 = arith.constant 0 : i32
    %c0_i32_1 = arith.constant 0 : i32
    return %c0_i32, %c0_i32_0 : i32, i32
  }
  func.func @transform_5(%arg0: i32) -> (i32, i32) {
    %c0_i32 = arith.constant 0 : i32
    %c0_i32_0 = arith.constant 0 : i32
    %c0_i32_1 = arith.constant 0 : i32
    return %c0_i32, %c0_i32_0 : i32, i32
  }
  func.func @transform_6(%arg0: i32) -> (i32, i32) {
    %c0_i32 = arith.constant 0 : i32
    %c0_i32_0 = arith.constant 0 : i32
    %c0_i32_1 = arith.constant 0 : i32
    return %c0_i32, %c0_i32_0 : i32, i32
  }
  func.func @transform_7(%arg0: i32) -> (i32, i32) {
    %c0_i32 = arith.constant 0 : i32
    %c0_i32_0 = arith.constant 0 : i32
    return %arg0, %c0_i32 : i32, i32
  }
}

</mosaic_0001>

<llo_original>
// kernel: encoder_layer_forward.3
$region0: #{encoder_layer_forward.3}
  #allocation0 [shape = 'u32[]', space=smem, size = 0x4, offset = 0x4, fixed_abs, tag = 'smem constant byte address 0x4 - core index']
  #allocation1 [shape = 'u32[144,128]{1,0:T(1,128)}', space=vmem, size = 0x12000, scoped, tag = 'internal scratch']
  %s0 = inlined_call_operand.vmem [shape: f32[32,128], index: 0, kind: input, shape index: {}]
  %s1 = inlined_call_operand.vmem [shape: f32[1,128], index: 1, kind: input, shape index: {}]
  %s2 = inlined_call_operand.vmem [shape: f32[1,128], index: 2, kind: input, shape index: {}]
  %s3 = inlined_call_operand.vmem [shape: bf16[128,256], index: 3, kind: input, shape index: {}]
  %s4 = inlined_call_operand.vmem [shape: f32[1,256], index: 4, kind: input, shape index: {}]
  %s5 = inlined_call_operand.vmem [shape: bf16[256,128], index: 5, kind: input, shape index: {}]
  %s6 = inlined_call_operand.vmem [shape: f32[1,128], index: 6, kind: input, shape index: {}]
  %s7 = inlined_call_operand.hbm [shape: f32[32,128], index: 7, kind: output, shape index: {}]
  %s8 = sld [smem:[#allocation0]]
  $region38: #{encoder_layer_forward.3} parent=0
    _
  %s10 = ssub.s32 1, %s8
  %s11 = scalar_select 0, %s10, %s8
  $region1: #{encoder_layer_forward.3} parent=0
    #allocation2 [shape = 'u8[16384]{0}', space=vmem, size = 0x4000, scoped, tag = 'output window, operand 0, single buffered']
    #allocation3 [shape = 's32[1]{0}', space=sflag, size = 0x4, scoped, tag = 'scoped memory for encoder_layer_forward.3']
    %12 = vsyncpa [#allocation3], 0
    // Predicated region
    $region2: #{encoder_layer_forward.3} parent=1 // pred_check
      _
    $region3: #{encoder_layer_forward.3} parent=1 // pred_check_branch
      %14 = sbr.rel (0) target = $region5
    $region4: #{encoder_layer_forward.3} parent=1 // pred_region
      _
    $region5: #{encoder_layer_forward.3} parent=1 // pred_fallthru
      _
    // Predicated region
    $region6: #{encoder_layer_forward.3} parent=1 // pred_check
      _
    $region7: #{encoder_layer_forward.3} parent=1 // pred_check_branch
      %16 = sbr.rel (0) target = $region9
    $region8: #{encoder_layer_forward.3} parent=1 // pred_region
      _
    $region9: #{encoder_layer_forward.3} parent=1 // pred_fallthru
      _
    // Predicated region
    $region10: #{encoder_layer_forward.3} parent=1 // pred_check
      _
    $region11: #{encoder_layer_forward.3} parent=1 // pred_check_branch
      %18 = sbr.rel (0) target = $region13
    $region12: #{encoder_layer_forward.3} parent=1 // pred_region
      _
    $region13: #{encoder_layer_forward.3} parent=1 // pred_fallthru
      _
    // Predicated region
    $region14: #{encoder_layer_forward.3} parent=1 // pred_check
      _
    $region15: #{encoder_layer_forward.3} parent=1 // pred_check_branch
      %20 = sbr.rel (0) target = $region17
    $region16: #{encoder_layer_forward.3} parent=1 // pred_region
      _
    $region17: #{encoder_layer_forward.3} parent=1 // pred_fallthru
      _
    // Predicated region
    $region18: #{encoder_layer_forward.3} parent=1 // pred_check
      _
    $region19: #{encoder_layer_forward.3} parent=1 // pred_check_branch
      %22 = sbr.rel (0) target = $region21
    $region20: #{encoder_layer_forward.3} parent=1 // pred_region
      _
    $region21: #{encoder_layer_forward.3} parent=1 // pred_fallthru
      _
    // Predicated region
    $region22: #{encoder_layer_forward.3} parent=1 // pred_check
      _
    $region23: #{encoder_layer_forward.3} parent=1 // pred_check_branch
      %24 = sbr.rel (0) target = $region25
    $region24: #{encoder_layer_forward.3} parent=1 // pred_region
      _
    $region25: #{encoder_layer_forward.3} parent=1 // pred_fallthru
      _
    // Predicated region
    $region26: #{encoder_layer_forward.3} parent=1 // pred_check
      _
    $region27: #{encoder_layer_forward.3} parent=1 // pred_check_branch
      %26 = sbr.rel (0) target = $region29
    $region28: #{encoder_layer_forward.3} parent=1 // pred_region
      _
    $region29: #{encoder_layer_forward.3} parent=1 // pred_fallthru
      _
    %v28 = vld [vmem:[%s0] sm:$0xff]
    %v29 = vld [vmem:[%s0 + $0x8] sm:$0xff]
    %v30 = vld [vmem:[%s0 + $0x10] sm:$0xff]
    %v31 = vld [vmem:[%s0 + $0x18] sm:$0xff]
    %v32 = vld [vmem:[%s1] sm:$0x1]
    %v33 = vld [vmem:[%s2] sm:$0x1]
    %34 = vadd.xlane.f32.xlu0 %v28
    %v35 = vpop.xlane.xlu0 %34
    %36 = vadd.xlane.f32.xlu0 %v29
    %v37 = vpop.xlane.xlu0 %36
    %38 = vadd.xlane.f32.xlu0 %v30
    %v39 = vpop.xlane.xlu0 %38
    %40 = vadd.xlane.f32.xlu0 %v31
    %v41 = vpop.xlane.xlu0 %40
    %v42 = vrcp.pop 128.0
    %v43 = vmul.f32 %v35, %v42
    %v44 = vmul.f32 %v37, %v42
    %v45 = vmul.f32 %v39, %v42
    %v46 = vmul.f32 %v41, %v42
    %v47 = vsub.f32 %v28, %v43
    %v48 = vsub.f32 %v29, %v44
    %v49 = vsub.f32 %v30, %v45
    %v50 = vsub.f32 %v31, %v46
    %v51 = vmul.f32 %v47, %v47
    %v52 = vmul.f32 %v48, %v48
    %v53 = vmul.f32 %v49, %v49
    %v54 = vmul.f32 %v50, %v50
    %55 = vadd.xlane.f32.xlu0 %v51
    %v56 = vpop.xlane.xlu0 %55
    %57 = vadd.xlane.f32.xlu0 %v52
    %v58 = vpop.xlane.xlu0 %57
    %59 = vadd.xlane.f32.xlu0 %v53
    %v60 = vpop.xlane.xlu0 %59
    %61 = vadd.xlane.f32.xlu0 %v54
    %v62 = vpop.xlane.xlu0 %61
    %v63 = vrcp.pop 127.0
    %v64 = vmul.f32 %v56, %v63
    %v65 = vmul.f32 %v58, %v63
    %v66 = vmul.f32 %v60, %v63
    %v67 = vmul.f32 %v62, %v63
    %v68 = vadd.f32 %v64, 1e-06
    %v69 = vadd.f32 %v65, 1e-06
    %v70 = vadd.f32 %v66, 1e-06
    %v71 = vadd.f32 %v67, 1e-06
    %v72 = vrsqrt.pop %v68
    %v73 = vrsqrt.pop %v69
    %v74 = vrsqrt.pop %v70
    %v75 = vrsqrt.pop %v71
    %v76 = vmul.f32 %v47, %v72
    %v77 = vmul.f32 %v48, %v73
    %v78 = vmul.f32 %v49, %v74
    %v79 = vmul.f32 %v50, %v75
    %v81 = vlaneseq
    %v82 = vshrl.u32 %v81, 7
    %v83 = vsub.s32 0, %v82
    %v84 = vrot.slane %v32, %v83
    %v86 = vmul.f32 %v84, %v76
    %v87 = vmul.f32 %v84, %v77
    %v88 = vmul.f32 %v84, %v78
    %v89 = vmul.f32 %v84, %v79
    %v91 = vlaneseq
    %v92 = vshrl.u32 %v91, 7
    %v93 = vsub.s32 0, %v92
    %v94 = vrot.slane %v33, %v93
    %v96 = vadd.f32 %v86, %v94
    %v97 = vadd.f32 %v87, %v94
    %v98 = vadd.f32 %v88, %v94
    %v99 = vadd.f32 %v89, %v94
    %v100 = vpack.c.bf16 %v97, %v96
    %v101 = vpack.c.bf16 %v99, %v98
    %v102 = vld [vmem:[%s3] sm:$0xff]
    %v103 = vld [vmem:[%s3 + $0x8] sm:$0xff]
    %v104 = vld [vmem:[%s3 + $0x10] sm:$0xff]
    %v105 = vld [vmem:[%s3 + $0x18] sm:$0xff]
    %v106 = vld [vmem:[%s3 + $0x20] sm:$0xff]
    %v107 = vld [vmem:[%s3 + $0x28] sm:$0xff]
    %v108 = vld [vmem:[%s3 + $0x30] sm:$0xff]
    %v109 = vld [vmem:[%s3 + $0x38] sm:$0xff]
    %v110 = vld [vmem:[%s3 + $0x40] sm:$0xff]
    %v111 = vld [vmem:[%s3 + $0x48] sm:$0xff]
    %v112 = vld [vmem:[%s3 + $0x50] sm:$0xff]
    %v113 = vld [vmem:[%s3 + $0x58] sm:$0xff]
    %v114 = vld [vmem:[%s3 + $0x60] sm:$0xff]
    %v115 = vld [vmem:[%s3 + $0x68] sm:$0xff]
    %v116 = vld [vmem:[%s3 + $0x70] sm:$0xff]
    %v117 = vld [vmem:[%s3 + $0x78] sm:$0xff]
    %v118 = vld [vmem:[%s4] sm:$0x3]
    %v120 = vlaneseq
    %v121 = vshrl.u32 %v120, 7
    %v122 = vsub.s32 0, %v121
    %v123 = vrot.slane %v118, %v122
    %v124 = vlaneseq
    %v125 = vshrl.u32 %v124, 7
    %v126 = vsub.s32 1, %v125
    %v127 = vrot.slane %v118, %v126
    %v146 = vunpack.c.l.b16 %v102
    %v147 = vunpack.c.h.b16 %v102
    %v148 = vunpack.c.l.b16 %v103
    %v149 = vunpack.c.h.b16 %v103
    %v150 = vunpack.c.l.b16 %v104
    %v151 = vunpack.c.h.b16 %v104
    %v152 = vunpack.c.l.b16 %v105
    %v153 = vunpack.c.h.b16 %v105
    %v154 = vunpack.c.l.b16 %v106
    %v155 = vunpack.c.h.b16 %v106
    %v156 = vunpack.c.l.b16 %v107
    %v157 = vunpack.c.h.b16 %v107
    %v158 = vunpack.c.l.b16 %v108
    %v159 = vunpack.c.h.b16 %v108
    %v160 = vunpack.c.l.b16 %v109
    %v161 = vunpack.c.h.b16 %v109
    %v162 = vunpack.c.l.b16 %v110
    %v163 = vunpack.c.h.b16 %v110
    %v164 = vunpack.c.l.b16 %v111
    %v165 = vunpack.c.h.b16 %v111
    %v166 = vunpack.c.l.b16 %v112
    %v167 = vunpack.c.h.b16 %v112
    %v168 = vunpack.c.l.b16 %v113
    %v169 = vunpack.c.h.b16 %v113
    %v170 = vunpack.c.l.b16 %v114
    %v171 = vunpack.c.h.b16 %v114
    %v172 = vunpack.c.l.b16 %v115
    %v173 = vunpack.c.h.b16 %v115
    %v174 = vunpack.c.l.b16 %v116
    %v175 = vunpack.c.h.b16 %v116
    %v176 = vunpack.c.l.b16 %v117
    %v177 = vunpack.c.h.b16 %v117
    %v178 = vpack.c.b16 %v148, %v146
    %v179 = vpack.c.b16 %v149, %v147
    %v180 = vpack.c.b16 %v152, %v150
    %v181 = vpack.c.b16 %v153, %v151
    %v182 = vpack.c.b16 %v156, %v154
    %v183 = vpack.c.b16 %v157, %v155
    %v184 = vpack.c.b16 %v160, %v158
    %v185 = vpack.c.b16 %v161, %v159
    %v186 = vpack.c.b16 %v164, %v162
    %v187 = vpack.c.b16 %v165, %v163
    %v188 = vpack.c.b16 %v168, %v166
    %v189 = vpack.c.b16 %v169, %v167
    %v190 = vpack.c.b16 %v172, %v170
    %v191 = vpack.c.b16 %v173, %v171
    %v192 = vpack.c.b16 %v176, %v174
    %v193 = vpack.c.b16 %v177, %v175
    %210 = vmatprep.subr.bf16.mxu0 %v179
    %211 = vmatpush1.bf16.msra.mxu0 %v178
    %212 = vmatprep.subr.bf16.mxu0 %v181
    %213 = vmatpush1.bf16.msra.mxu0 %v180
    %214 = vmatprep.subr.bf16.mxu0 %v183
    %215 = vmatpush1.bf16.msra.mxu0 %v182
    %216 = vmatprep.subr.bf16.mxu0 %v185
    %217 = vmatpush1.bf16.msra.mxu0 %v184
    %218 = vmatprep.subr.bf16.mxu0 %v187
    %219 = vmatpush1.bf16.msra.mxu0 %v186
    %220 = vmatprep.subr.bf16.mxu0 %v189
    %221 = vmatpush1.bf16.msra.mxu0 %v188
    %222 = vmatprep.subr.bf16.mxu0 %v191
    %223 = vmatpush1.bf16.msra.mxu0 %v190
    %224 = vmatprep.subr.bf16.mxu0 %v193
    %225 = vmatpush1.bf16.msra.mxu0 %v192
    %226 = vmatprep.subr.bf16.mxu0 0
    %227 = vmatpush1.bf16.msra.mxu0 0
    %228 = vmatprep.subr.bf16.mxu0 0
    %229 = vmatpush1.bf16.msra.mxu0 0
    %230 = vmatprep.subr.bf16.mxu0 0
    %231 = vmatpush1.bf16.msra.mxu0 0
    %232 = vmatprep.subr.bf16.mxu0 0
    %233 = vmatpush1.bf16.msra.mxu0 0
    %234 = vmatprep.subr.bf16.mxu0 0
    %235 = vmatpush1.bf16.msra.mxu0 0
    %236 = vmatprep.subr.bf16.mxu0 0
    %237 = vmatpush1.bf16.msra.mxu0 0
    %238 = vmatprep.subr.bf16.mxu0 0
    %239 = vmatpush1.bf16.msra.mxu0 0
    %240 = vmatprep.subr.bf16.mxu0 0
    %241 = vmatpush1.bf16.msra.mxu0 0
    %242 = vmatprep.mubr.bf16.mxu0 0
    %243 = vmatmul.mubr.bf16.gmra.mrb[0].mxu0 %v100
    %v244 = vpop.f32.mrb[0].mxu0
    %v245 = vadd.f32 %v123, %v244
    %v246 = vpop.f32.mrb[0].mxu0
    %v247 = vadd.f32 %v127, %v246
    %v248 = vpop.f32.mrb[0].mxu0
    %v249 = vadd.f32 %v123, %v248
    %v250 = vpop.f32.mrb[0].mxu0
    %v251 = vadd.f32 %v127, %v250
    %252 = vmatprep.mubr.bf16.mxu0 0
    %253 = vmatmul.mubr.bf16.gmra.mrb[0].mxu0 %v101
    %v254 = vpop.f32.mrb[0].mxu0
    %v255 = vadd.f32 %v123, %v254
    %v256 = vpop.f32.mrb[0].mxu0
    %v257 = vadd.f32 %v127, %v256
    %v258 = vpop.f32.mrb[0].mxu0
    %v259 = vadd.f32 %v123, %v258
    %v260 = vpop.f32.mrb[0].mxu0
    %v261 = vadd.f32 %v127, %v260
    %262 = vdwg.mxu0
    %v263 = vmax.f32 %v245, 0.0
    %v264 = vmax.f32 %v247, 0.0
    %v265 = vmax.f32 %v249, 0.0
    %v266 = vmax.f32 %v251, 0.0
    %v267 = vmax.f32 %v255, 0.0
    %v268 = vmax.f32 %v257, 0.0
    %v269 = vmax.f32 %v259, 0.0
    %v270 = vmax.f32 %v261, 0.0
    %v271 = vpack.c.bf16 %v265, %v263
    %v272 = vpack.c.bf16 %v266, %v264
    %v273 = vpack.c.bf16 %v269, %v267
    %v274 = vpack.c.bf16 %v270, %v268
    %v275 = vld [vmem:[%s5] sm:$0xf]
    %v276 = vld [vmem:[%s5 + $0x4] sm:$0xf]
    %v277 = vld [vmem:[%s5 + $0x8] sm:$0xf]
    %v278 = vld [vmem:[%s5 + $0xc] sm:$0xf]
    %v279 = vld [vmem:[%s5 + $0x10] sm:$0xf]
    %v280 = vld [vmem:[%s5 + $0x14] sm:$0xf]
    %v281 = vld [vmem:[%s5 + $0x18] sm:$0xf]
    %v282 = vld [vmem:[%s5 + $0x1c] sm:$0xf]
    %v283 = vld [vmem:[%s5 + $0x20] sm:$0xf]
    %v284 = vld [vmem:[%s5 + $0x24] sm:$0xf]
    %v285 = vld [vmem:[%s5 + $0x28] sm:$0xf]
    %v286 = vld [vmem:[%s5 + $0x2c] sm:$0xf]
    %v287 = vld [vmem:[%s5 + $0x30] sm:$0xf]
    %v288 = vld [vmem:[%s5 + $0x34] sm:$0xf]
    %v289 = vld [vmem:[%s5 + $0x38] sm:$0xf]
    %v290 = vld [vmem:[%s5 + $0x3c] sm:$0xf]
    %v291 = vld [vmem:[%s5 + $0x40] sm:$0xf]
    %v292 = vld [vmem:[%s5 + $0x44] sm:$0xf]
    %v293 = vld [vmem:[%s5 + $0x48] sm:$0xf]
    %v294 = vld [vmem:[%s5 + $0x4c] sm:$0xf]
    %v295 = vld [vmem:[%s5 + $0x50] sm:$0xf]
    %v296 = vld [vmem:[%s5 + $0x54] sm:$0xf]
    %v297 = vld [vmem:[%s5 + $0x58] sm:$0xf]
    %v298 = vld [vmem:[%s5 + $0x5c] sm:$0xf]
    %v299 = vld [vmem:[%s5 + $0x60] sm:$0xf]
    %v300 = vld [vmem:[%s5 + $0x64] sm:$0xf]
    %v301 = vld [vmem:[%s5 + $0x68] sm:$0xf]
    %v302 = vld [vmem:[%s5 + $0x6c] sm:$0xf]
    %v303 = vld [vmem:[%s5 + $0x70] sm:$0xf]
    %v304 = vld [vmem:[%s5 + $0x74] sm:$0xf]
    %v305 = vld [vmem:[%s5 + $0x78] sm:$0xf]
    %v306 = vld [vmem:[%s5 + $0x7c] sm:$0xf]
    %v307 = vld [vmem:[%s6] sm:$0x1]
    %v309 = vlaneseq
    %v310 = vshrl.u32 %v309, 7
    %v311 = vsub.s32 0, %v310
    %v312 = vrot.slane %v307, %v311
    %v346 = vunpack.c.l.b16 %v275
    %v347 = vunpack.c.l.b16 %v276
    %v348 = vunpack.c.l.b16 %v277
    %v349 = vunpack.c.l.b16 %v278
    %v350 = vunpack.c.l.b16 %v279
    %v351 = vunpack.c.l.b16 %v280
    %v352 = vunpack.c.l.b16 %v281
    %v353 = vunpack.c.l.b16 %v282
    %v354 = vunpack.c.l.b16 %v283
    %v355 = vunpack.c.l.b16 %v284
    %v356 = vunpack.c.l.b16 %v285
    %v357 = vunpack.c.l.b16 %v286
    %v358 = vunpack.c.l.b16 %v287
    %v359 = vunpack.c.l.b16 %v288
    %v360 = vunpack.c.l.b16 %v289
    %v361 = vunpack.c.l.b16 %v290
    %v362 = vunpack.c.l.b16 %v291
    %v363 = vunpack.c.l.b16 %v292
    %v364 = vunpack.c.l.b16 %v293
    %v365 = vunpack.c.l.b16 %v294
    %v366 = vunpack.c.l.b16 %v295
    %v367 = vunpack.c.l.b16 %v296
    %v368 = vunpack.c.l.b16 %v297
    %v369 = vunpack.c.l.b16 %v298
    %v370 = vunpack.c.l.b16 %v299
    %v371 = vunpack.c.l.b16 %v300
    %v372 = vunpack.c.l.b16 %v301
    %v373 = vunpack.c.l.b16 %v302
    %v374 = vunpack.c.l.b16 %v303
    %v375 = vunpack.c.l.b16 %v304
    %v376 = vunpack.c.l.b16 %v305
    %v377 = vunpack.c.l.b16 %v306
    %v378 = vpack.c.b16 %v347, %v346
    %v379 = vpack.c.b16 %v349, %v348
    %v380 = vpack.c.b16 %v351, %v350
    %v381 = vpack.c.b16 %v353, %v352
    %v382 = vpack.c.b16 %v355, %v354
    %v383 = vpack.c.b16 %v357, %v356
    %v384 = vpack.c.b16 %v359, %v358
    %v385 = vpack.c.b16 %v361, %v360
    %v386 = vpack.c.b16 %v363, %v362
    %v387 = vpack.c.b16 %v365, %v364
    %v388 = vpack.c.b16 %v367, %v366
    %v389 = vpack.c.b16 %v369, %v368
    %v390 = vpack.c.b16 %v371, %v370
    %v391 = vpack.c.b16 %v373, %v372
    %v392 = vpack.c.b16 %v375, %v374
    %v393 = vpack.c.b16 %v377, %v376
    %410 = vmatprep.subr.bf16.mxu0 0
    %411 = vmatpush1.bf16.msra.mxu0 %v378
    %412 = vmatprep.subr.bf16.mxu0 0
    %413 = vmatpush1.bf16.msra.mxu0 %v379
    %414 = vmatprep.subr.bf16.mxu0 0
    %415 = vmatpush1.bf16.msra.mxu0 %v380
    %416 = vmatprep.subr.bf16.mxu0 0
    %417 = vmatpush1.bf16.msra.mxu0 %v381
    %418 = vmatprep.subr.bf16.mxu0 0
    %419 = vmatpush1.bf16.msra.mxu0 %v382
    %420 = vmatprep.subr.bf16.mxu0 0
    %421 = vmatpush1.bf16.msra.mxu0 %v383
    %422 = vmatprep.subr.bf16.mxu0 0
    %423 = vmatpush1.bf16.msra.mxu0 %v384
    %424 = vmatprep.subr.bf16.mxu0 0
    %425 = vmatpush1.bf16.msra.mxu0 %v385
    %426 = vmatprep.subr.bf16.mxu0 0
    %427 = vmatpush1.bf16.msra.mxu0 %v386
    %428 = vmatprep.subr.bf16.mxu0 0
    %429 = vmatpush1.bf16.msra.mxu0 %v387
    %430 = vmatprep.subr.bf16.mxu0 0
    %431 = vmatpush1.bf16.msra.mxu0 %v388
    %432 = vmatprep.subr.bf16.mxu0 0
    %433 = vmatpush1.bf16.msra.mxu0 %v389
    %434 = vmatprep.subr.bf16.mxu0 0
    %435 = vmatpush1.bf16.msra.mxu0 %v390
    %436 = vmatprep.subr.bf16.mxu0 0
    %437 = vmatpush1.bf16.msra.mxu0 %v391
    %438 = vmatprep.subr.bf16.mxu0 0
    %439 = vmatpush1.bf16.msra.mxu0 %v392
    %440 = vmatprep.subr.bf16.mxu0 0
    %441 = vmatpush1.bf16.msra.mxu0 %v393
    %442 = vmatprep.mubr.bf16.mxu0 %v272
    %443 = vmatmul.mubr.bf16.gmra.mrb[0].mxu0 %v271
    %v444 = vpop.f32.mrb[0].mxu0
    %v445 = vadd.f32 %v312, %v444
    %v446 = vpop.f32.mrb[0].mxu0
    %v447 = vpop.f32.mrb[0].mxu0
    %v448 = vadd.f32 %v312, %v447
    %v449 = vpop.f32.mrb[0].mxu0
    %450 = vmatprep.mubr.bf16.mxu0 %v274
    %451 = vmatmul.mubr.bf16.gmra.mrb[0].mxu0 %v273
    %v452 = vpop.f32.mrb[0].mxu0
    %v453 = vadd.f32 %v312, %v452
    %v454 = vpop.f32.mrb[0].mxu0
    %v455 = vpop.f32.mrb[0].mxu0
    %v456 = vadd.f32 %v312, %v455
    %v457 = vpop.f32.mrb[0].mxu0
    %458 = vdwg.mxu0
    %v459 = vadd.f32 %v445, %v28
    %v460 = vadd.f32 %v448, %v29
    %v461 = vadd.f32 %v453, %v30
    %v462 = vadd.f32 %v456, %v31
    %463 = vst [vmem:[#allocation2] sm:$0xff] %v459
    %464 = vst [vmem:[#allocation2 + $0x8] sm:$0xff] %v460
    %465 = vst [vmem:[#allocation2 + $0x10] sm:$0xff] %v461
    %466 = vst [vmem:[#allocation2 + $0x18] sm:$0xff] %v462
    // Predicated region
    $region30: #{encoder_layer_forward.3} parent=1 // pred_check
      _
    $region31: #{encoder_layer_forward.3} parent=1 // pred_check_branch
      %468 = sbr.rel (0) target = $region33
    $region32: #{encoder_layer_forward.3} parent=1 // pred_region
      %s470 = ssub.s32 512, 512
      %471 = vsyncadd [#allocation3], %s470
      %s472 = sshll.u32 [#allocation2], 4
      %s473 = int_to_ptr.vmem [resolvable:$true] %s472
      %478 = dma.vmem_to_hbm [thread:$0]  %s473, 512, %s7, [#allocation3], 128, 128, 8
    $region33: #{encoder_layer_forward.3} parent=1 // pred_fallthru
      _
    // Predicated region
    $region34: #{encoder_layer_forward.3} parent=1 // pred_check
      _
    $region35: #{encoder_layer_forward.3} parent=1 // pred_check_branch
      %480 = sbr.rel (0) target = $region37
    $region36: #{encoder_layer_forward.3} parent=1 // pred_region
      %481 = dma.done [#allocation3], 512
    $region37: #{encoder_layer_forward.3} parent=1 // pred_fallthru
      _
    %482 = vsyncpa [#allocation3], 1

// kernel: encoder_layer_forward.2
$region0: #{encoder_layer_forward.2}
  #allocation0 [shape = 'u32[]', space=smem, size = 0x4, offset = 0x4, fixed_abs, tag = 'smem constant byte address 0x4 - core index']
  #allocation1 [shape = 'u32[144,128]{1,0:T(1,128)}', space=vmem, size = 0x12000, scoped, tag = 'internal scratch']
  %s0 = inlined_call_operand.vmem [shape: f32[2,16,128], index: 0, kind: input, shape index: {}]
  %s1 = inlined_call_operand.vmem [shape: f32[2,1,16], index: 1, kind: input, shape index: {}]
  %s2 = inlined_call_operand.vmem [shape: f32[1,128], index: 2, kind: input, shape index: {}]
  %s3 = inlined_call_operand.vmem [shape: f32[1,128], index: 3, kind: input, shape index: {}]
  %s4 = inlined_call_operand.vmem [shape: bf16[128,384], index: 4, kind: input, shape index: {}]
  %s5 = inlined_call_operand.vmem [shape: f32[1,384], index: 5, kind: input, shape index: {}]
  %s6 = inlined_call_operand.vmem [shape: bf16[128,128], index: 6, kind: input, shape index: {}]
  %s7 = inlined_call_operand.vmem [shape: f32[1,128], index: 7, kind: input, shape index: {}]
  %s8 = inlined_call_operand.vmem [shape: f32[2,16,128], index: 8, kind: output, shape index: {}]
  %s9 = sld [smem:[#allocation0]]
  $region65: #{encoder_layer_forward.2} parent=0
    _
  %s11 = ssub.s32 1, %s9
  %s12 = scalar_select 0, %s11, %s9
  loop: start=0, step=1, limit=4
  $region2: #{encoder_layer_forward.2} parent=0 // loop_pre_header
    _
  $region3: #{encoder_layer_forward.2} parent=0 // loop_header
    %s14 = sphi 0, %s18
    %p15 = scmp.ge.s32.totalorder %s14, 4
    %s24 = sphi 0, %s26
    %s27 = sphi 0, %s24
    %s28 = sphi 0, %s27
    %s44 = sphi 0, %s28
    %s50 = sphi 0, %s52
    %s53 = sphi 0, %s50
    %s54 = sphi 0, %s53
    %s70 = sphi 0, %s54
    %s74 = sphi 0, %s74
    %s76 = sphi 0, %s74
    %s77 = sphi 0, %s76
    %s91 = sphi 0, %s77
    %s95 = sphi 0, %s95
    %s97 = sphi 0, %s95
    %s98 = sphi 0, %s97
    %s112 = sphi 0, %s98
    %s116 = sphi 0, %s116
    %s118 = sphi 0, %s116
    %s119 = sphi 0, %s118
    %s133 = sphi 0, %s119
    %s137 = sphi 0, %s137
    %s139 = sphi 0, %s137
    %s140 = sphi 0, %s139
    %s154 = sphi 0, %s140
    %s158 = sphi 0, %s158
    %s160 = sphi 0, %s158
    %s161 = sphi 0, %s160
    %s175 = sphi 0, %s161
    %s179 = sphi 0, %s179
    %s181 = sphi 0, %s179
    %s182 = sphi 0, %s181
    %s196 = sphi 0, %s182
    %s202 = sphi 0, %s204
    %s205 = sphi 0, %s202
    %s206 = sphi 0, %s205
    %s222 = sphi 0, %s206
  $region4: #{encoder_layer_forward.2} parent=0 // loop_header_branch
    %17 = sbr.rel (%p15) target = $region8
  $region5: #{encoder_layer_forward.2} parent=0 // loop_body
    %s19 = ssub.s32 %s14, 1
    %s20 = ssub.s32 %s14, 2
    %s21 = sadd.s32 %s14, 1
    %s22 = ssub.s32 %s14, %s21
    %p23 = scmp.eq.s32.totalorder %s22, 0
    %s25 = sadd.s32 %s24, 1
    %s26 = scalar_select %p23, %s24, %s25
    %p29 = pneg %p23
    %p30 = scmp.eq.s32.totalorder %s14, 1
    %p31 = por %p29, %p30
    %p32 = scmp.ne.s32.totalorder %s24, %s27
    %p33 = scmp.eq.s32.totalorder %s14, 0
    %p34 = por %p32, %p33
    %p35 = scmp.ne.s32.totalorder %s24, %s27
    %p36 = scmp.eq.s32.totalorder %s19, 1
    %p37 = por %p35, %p36
    %p38 = scmp.ne.s32.totalorder %s27, %s28
    %p39 = scmp.eq.s32.totalorder %s19, 0
    %p40 = por %p38, %p39
    %p41 = scmp.ne.s32.totalorder %s27, %s28
    %p42 = scmp.eq.s32.totalorder %s20, 1
    %p43 = por %p41, %p42
    %p45 = scmp.ne.s32.totalorder %s28, %s44
    %p46 = scmp.eq.s32.totalorder %s20, 0
    %p47 = por %p45, %p46
    %s48 = ssub.s32 %s14, %s21
    %p49 = scmp.eq.s32.totalorder %s48, 0
    %s51 = sadd.s32 %s50, 1
    %s52 = scalar_select %p49, %s50, %s51
    %p55 = pneg %p49
    %p56 = scmp.eq.s32.totalorder %s14, 1
    %p57 = por %p55, %p56
    %p58 = scmp.ne.s32.totalorder %s50, %s53
    %p59 = scmp.eq.s32.totalorder %s14, 0
    %p60 = por %p58, %p59
    %p61 = scmp.ne.s32.totalorder %s50, %s53
    %p62 = scmp.eq.s32.totalorder %s19, 1
    %p63 = por %p61, %p62
    %p64 = scmp.ne.s32.totalorder %s53, %s54
    %p65 = scmp.eq.s32.totalorder %s19, 0
    %p66 = por %p64, %p65
    %p67 = scmp.ne.s32.totalorder %s53, %s54
    %p68 = scmp.eq.s32.totalorder %s20, 1
    %p69 = por %p67, %p68
    %p71 = scmp.ne.s32.totalorder %s54, %s70
    %p72 = scmp.eq.s32.totalorder %s20, 0
    %p73 = por %p71, %p72
    %s75 = sadd.s32 %s74, 1
    %p78 = scmp.eq.s32.totalorder %s14, 1
    %p79 = scmp.ne.s32.totalorder %s74, %s76
    %p80 = scmp.eq.s32.totalorder %s14, 0
    %p81 = por %p79, %p80
    %p82 = scmp.ne.s32.totalorder %s74, %s76
    %p83 = scmp.eq.s32.totalorder %s19, 1
    %p84 = por %p82, %p83
    %p85 = scmp.ne.s32.totalorder %s76, %s77
    %p86 = scmp.eq.s32.totalorder %s19, 0
    %p87 = por %p85, %p86
    %p88 = scmp.ne.s32.totalorder %s76, %s77
    %p89 = scmp.eq.s32.totalorder %s20, 1
    %p90 = por %p88, %p89
    %p92 = scmp.ne.s32.totalorder %s77, %s91
    %p93 = scmp.eq.s32.totalorder %s20, 0
    %p94 = por %p92, %p93
    %s96 = sadd.s32 %s95, 1
    %p99 = scmp.eq.s32.totalorder %s14, 1
    %p100 = scmp.ne.s32.totalorder %s95, %s97
    %p101 = scmp.eq.s32.totalorder %s14, 0
    %p102 = por %p100, %p101
    %p103 = scmp.ne.s32.totalorder %s95, %s97
    %p104 = scmp.eq.s32.totalorder %s19, 1
    %p105 = por %p103, %p104
    %p106 = scmp.ne.s32.totalorder %s97, %s98
    %p107 = scmp.eq.s32.totalorder %s19, 0
    %p108 = por %p106, %p107
    %p109 = scmp.ne.s32.totalorder %s97, %s98
    %p110 = scmp.eq.s32.totalorder %s20, 1
    %p111 = por %p109, %p110
    %p113 = scmp.ne.s32.totalorder %s98, %s112
    %p114 = scmp.eq.s32.totalorder %s20, 0
    %p115 = por %p113, %p114
    %s117 = sadd.s32 %s116, 1
    %p120 = scmp.eq.s32.totalorder %s14, 1
    %p121 = scmp.ne.s32.totalorder %s116, %s118
    %p122 = scmp.eq.s32.totalorder %s14, 0
    %p123 = por %p121, %p122
    %p124 = scmp.ne.s32.totalorder %s116, %s118
    %p125 = scmp.eq.s32.totalorder %s19, 1
    %p126 = por %p124, %p125
    %p127 = scmp.ne.s32.totalorder %s118, %s119
    %p128 = scmp.eq.s32.totalorder %s19, 0
    %p129 = por %p127, %p128
    %p130 = scmp.ne.s32.totalorder %s118, %s119
    %p131 = scmp.eq.s32.totalorder %s20, 1
    %p132 = por %p130, %p131
    %p134 = scmp.ne.s32.totalorder %s119, %s133
    %p135 = scmp.eq.s32.totalorder %s20, 0
    %p136 = por %p134, %p135
    %s138 = sadd.s32 %s137, 1
    %p141 = scmp.eq.s32.totalorder %s14, 1
    %p142 = scmp.ne.s32.totalorder %s137, %s139
    %p143 = scmp.eq.s32.totalorder %s14, 0
    %p144 = por %p142, %p143
    %p145 = scmp.ne.s32.totalorder %s137, %s139
    %p146 = scmp.eq.s32.totalorder %s19, 1
    %p147 = por %p145, %p146
    %p148 = scmp.ne.s32.totalorder %s139, %s140
    %p149 = scmp.eq.s32.totalorder %s19, 0
    %p150 = por %p148, %p149
    %p151 = scmp.ne.s32.totalorder %s139, %s140
    %p152 = scmp.eq.s32.totalorder %s20, 1
    %p153 = por %p151, %p152
    %p155 = scmp.ne.s32.totalorder %s140, %s154
    %p156 = scmp.eq.s32.totalorder %s20, 0
    %p157 = por %p155, %p156
    %s159 = sadd.s32 %s158, 1
    %p162 = scmp.eq.s32.totalorder %s14, 1
    %p163 = scmp.ne.s32.totalorder %s158, %s160
    %p164 = scmp.eq.s32.totalorder %s14, 0
    %p165 = por %p163, %p164
    %p166 = scmp.ne.s32.totalorder %s158, %s160
    %p167 = scmp.eq.s32.totalorder %s19, 1
    %p168 = por %p166, %p167
    %p169 = scmp.ne.s32.totalorder %s160, %s161
    %p170 = scmp.eq.s32.totalorder %s19, 0
    %p171 = por %p169, %p170
    %p172 = scmp.ne.s32.totalorder %s160, %s161
    %p173 = scmp.eq.s32.totalorder %s20, 1
    %p174 = por %p172, %p173
    %p176 = scmp.ne.s32.totalorder %s161, %s175
    %p177 = scmp.eq.s32.totalorder %s20, 0
    %p178 = por %p176, %p177
    %s180 = sadd.s32 %s179, 1
    %p183 = scmp.eq.s32.totalorder %s14, 1
    %p184 = scmp.ne.s32.totalorder %s179, %s181
    %p185 = scmp.eq.s32.totalorder %s14, 0
    %p186 = por %p184, %p185
    %p187 = scmp.ne.s32.totalorder %s179, %s181
    %p188 = scmp.eq.s32.totalorder %s19, 1
    %p189 = por %p187, %p188
    %p190 = scmp.ne.s32.totalorder %s181, %s182
    %p191 = scmp.eq.s32.totalorder %s19, 0
    %p192 = por %p190, %p191
    %p193 = scmp.ne.s32.totalorder %s181, %s182
    %p194 = scmp.eq.s32.totalorder %s20, 1
    %p195 = por %p193, %p194
    %p197 = scmp.ne.s32.totalorder %s182, %s196
    %p198 = scmp.eq.s32.totalorder %s20, 0
    %p199 = por %p197, %p198
    %s200 = ssub.s32 %s14, %s21
    %p201 = scmp.eq.s32.totalorder %s200, 0
    %s203 = sadd.s32 %s202, 1
    %s204 = scalar_select %p201, %s202, %s203
    %p207 = pneg %p201
    %p208 = scmp.eq.s32.totalorder %s14, 1
    %p209 = por %p207, %p208
    %p210 = scmp.ne.s32.totalorder %s202, %s205
    %p211 = scmp.eq.s32.totalorder %s14, 0
    %p212 = por %p210, %p211
    %p213 = scmp.ne.s32.totalorder %s202, %s205
    %p214 = scmp.eq.s32.totalorder %s19, 1
    %p215 = por %p213, %p214
    %p216 = scmp.ne.s32.totalorder %s205, %s206
    %p217 = scmp.eq.s32.totalorder %s19, 0
    %p218 = por %p216, %p217
    %p219 = scmp.ne.s32.totalorder %s205, %s206
    %p220 = scmp.eq.s32.totalorder %s20, 1
    %p221 = por %p219, %p220
    %p223 = scmp.ne.s32.totalorder %s206, %s222
    %p224 = scmp.eq.s32.totalorder %s20, 0
    %p225 = por %p223, %p224
    %p226 = scmp.le.s32.totalorder 1, %s14
    %p227 = scmp.lt.s32.totalorder %s14, 3
    %p228 = pnand %p226, %p227
    %p229 = pneg %p228
    // Predicated region
    $region9: #{encoder_layer_forward.2} parent=5 // pred_check
      _
    $region10: #{encoder_layer_forward.2} parent=5 // pred_check_branch
      %231 = sbr.rel (%p228) target = $region12
    $region11: #{encoder_layer_forward.2} parent=5 // pred_region
      %s232 = ssub.s32 %s14, 1
      // Predicated region
      $region13: #{encoder_layer_forward.2} parent=11 // pred_check
        %p233 = pneg %p87
      $region14: #{encoder_layer_forward.2} parent=11 // pred_check_branch
        %235 = sbr.rel (%p233) target = $region16
      $region15: #{encoder_layer_forward.2} parent=11 // pred_region
        _
      $region16: #{encoder_layer_forward.2} parent=11 // pred_fallthru
        _
      // Predicated region
      $region17: #{encoder_layer_forward.2} parent=11 // pred_check
        %p236 = pneg %p108
      $region18: #{encoder_layer_forward.2} parent=11 // pred_check_branch
        %238 = sbr.rel (%p236) target = $region20
      $region19: #{encoder_layer_forward.2} parent=11 // pred_region
        _
      $region20: #{encoder_layer_forward.2} parent=11 // pred_fallthru
        _
      // Predicated region
      $region21: #{encoder_layer_forward.2} parent=11 // pred_check
        %p239 = pneg %p129
      $region22: #{encoder_layer_forward.2} parent=11 // pred_check_branch
        %241 = sbr.rel (%p239) target = $region24
      $region23: #{encoder_layer_forward.2} parent=11 // pred_region
        _
      $region24: #{encoder_layer_forward.2} parent=11 // pred_fallthru
        _
      // Predicated region
      $region25: #{encoder_layer_forward.2} parent=11 // pred_check
        %p242 = pneg %p150
      $region26: #{encoder_layer_forward.2} parent=11 // pred_check_branch
        %244 = sbr.rel (%p242) target = $region28
      $region27: #{encoder_layer_forward.2} parent=11 // pred_region
        _
      $region28: #{encoder_layer_forward.2} parent=11 // pred_fallthru
        _
      // Predicated region
      $region29: #{encoder_layer_forward.2} parent=11 // pred_check
        %p245 = pneg %p171
      $region30: #{encoder_layer_forward.2} parent=11 // pred_check_branch
        %247 = sbr.rel (%p245) target = $region32
      $region31: #{encoder_layer_forward.2} parent=11 // pred_region
        _
      $region32: #{encoder_layer_forward.2} parent=11 // pred_fallthru
        _
      // Predicated region
      $region33: #{encoder_layer_forward.2} parent=11 // pred_check
        %p248 = pneg %p192
      $region34: #{encoder_layer_forward.2} parent=11 // pred_check_branch
        %250 = sbr.rel (%p248) target = $region36
      $region35: #{encoder_layer_forward.2} parent=11 // pred_region
        _
      $region36: #{encoder_layer_forward.2} parent=11 // pred_fallthru
        _
    $region12: #{encoder_layer_forward.2} parent=5 // pred_fallthru
      _
    %p251 = scmp.lt.s32.totalorder %s14, 2
    // Predicated region
    $region37: #{encoder_layer_forward.2} parent=5 // pred_check
      %p252 = pneg %p251
    $region38: #{encoder_layer_forward.2} parent=5 // pred_check_branch
      %254 = sbr.rel (%p252) target = $region40
    $region39: #{encoder_layer_forward.2} parent=5 // pred_region
      // Predicated region
      $region41: #{encoder_layer_forward.2} parent=39 // pred_check
        %p255 = pneg %p34
      $region42: #{encoder_layer_forward.2} parent=39 // pred_check_branch
        %257 = sbr.rel (%p255) target = $region44
      $region43: #{encoder_layer_forward.2} parent=39 // pred_region
        %p258 = scmp.lt.s32.totalorder %s14, 1
        %s259 = scalar_select %p258, %s14, 1
        %s260 = smul.addr %s259, 2
        %s261 = smul.addr %s260, 8
        %s262 = scalar_lea.vmem %s0, %s261
      $region44: #{encoder_layer_forward.2} parent=39 // pred_fallthru
        _
      // Predicated region
      $region45: #{encoder_layer_forward.2} parent=39 // pred_check
        %p263 = pneg %p60
      $region46: #{encoder_layer_forward.2} parent=39 // pred_check_branch
        %265 = sbr.rel (%p263) target = $region48
      $region47: #{encoder_layer_forward.2} parent=39 // pred_region
        %p266 = scmp.lt.s32.totalorder %s14, 1
        %s267 = scalar_select %p266, %s14, 1
        %s268 = scalar_lea.vmem %s1, %s267
      $region48: #{encoder_layer_forward.2} parent=39 // pred_fallthru
        _
    $region40: #{encoder_layer_forward.2} parent=5 // pred_fallthru
      _
    %p269 = scmp.le.s32.totalorder 1, %s14
    %p270 = scmp.lt.s32.totalorder %s14, 3
    %p271 = pnand %p269, %p270
    %p272 = pneg %p271
    // Predicated region
    $region49: #{encoder_layer_forward.2} parent=5 // pred_check
      _
    $region50: #{encoder_layer_forward.2} parent=5 // pred_check_branch
      %274 = sbr.rel (%p271) target = $region52
    $region51: #{encoder_layer_forward.2} parent=5 // pred_region
      %s275 = ssub.s32 %s14, 1
      %p276 = scmp.lt.s32.totalorder %s19, 1
      %s277 = scalar_select %p276, %s19, 1
      %s278 = smul.addr %s277, 2
      %s279 = smul.addr %s278, 8
      %s280 = scalar_lea.vmem %s0, %s279
      %p281 = pneg %p40
      %p282 = pneg %p37
      %p283 = scmp.lt.s32.totalorder %s19, 1
      %s284 = scalar_select %p283, %s19, 1
      %s285 = scalar_lea.vmem %s1, %s284
      %p286 = pneg %p66
      %p287 = pneg %p63
      %p288 = pneg %p87
      %p289 = pneg %p84
      %p290 = pneg %p108
      %p291 = pneg %p105
      %p292 = pneg %p129
      %p293 = pneg %p126
      %p294 = pneg %p150
      %p295 = pneg %p147
      %p296 = pneg %p171
      %p297 = pneg %p168
      %p298 = pneg %p192
      %p299 = pneg %p189
      %p300 = pneg %p218
      %p301 = pneg %p215
      %p302 = scmp.lt.s32.totalorder %s19, 1
      %s303 = scalar_select %p302, %s19, 1
      %s304 = smul.addr %s303, 2
      %s305 = smul.addr %s304, 8
      %s306 = scalar_lea.vmem %s8, %s305
      %p307 = scmp.lt.s32.totalorder %s19, 1
      %s308 = scalar_select %p307, %s19, 1
      %s309 = smul.addr %s308, 2
      %s310 = smul.addr %s309, 8
      %s311 = scalar_lea.vmem %s0, %s310
      %p312 = scmp.lt.s32.totalorder %s19, 1
      %s313 = scalar_select %p312, %s19, 1
      %s314 = scalar_lea.vmem %s1, %s313
      %p315 = scmp.lt.s32.totalorder %s19, 1
      %s316 = scalar_select %p315, %s19, 1
      %s317 = smul.addr %s316, 2
      %s318 = smul.addr %s317, 8
      %s319 = scalar_lea.vmem %s8, %s318
      %v321 = vld [vmem:[%s311] sm:$0xff]
      %v322 = vld [vmem:[%s311 + $0x8] sm:$0xff]
      %v323 = vld [vmem:[%s2] sm:$0x1]
      %v324 = vld [vmem:[%s3] sm:$0x1]
      %325 = vadd.xlane.f32.xlu0 %v321
      %v326 = vpop.xlane.xlu0 %325
      %327 = vadd.xlane.f32.xlu0 %v322
      %v328 = vpop.xlane.xlu0 %327
      %v329 = vrcp.pop 128.0
      %v330 = vmul.f32 %v326, %v329
      %v331 = vmul.f32 %v328, %v329
      %v332 = vsub.f32 %v321, %v330
      %v333 = vsub.f32 %v322, %v331
      %v334 = vmul.f32 %v332, %v332
      %v335 = vmul.f32 %v333, %v333
      %336 = vadd.xlane.f32.xlu0 %v334
      %v337 = vpop.xlane.xlu0 %336
      %338 = vadd.xlane.f32.xlu0 %v335
      %v339 = vpop.xlane.xlu0 %338
      %v340 = vrcp.pop 127.0
      %v341 = vmul.f32 %v337, %v340
      %v342 = vmul.f32 %v339, %v340
      %v343 = vadd.f32 %v341, 1e-06
      %v344 = vadd.f32 %v342, 1e-06
      %v345 = vrsqrt.pop %v343
      %v346 = vrsqrt.pop %v344
      %v347 = vmul.f32 %v332, %v345
      %v348 = vmul.f32 %v333, %v346
      %v350 = vlaneseq
      %v351 = vshrl.u32 %v350, 7
      %v352 = vsub.s32 0, %v351
      %v353 = vrot.slane %v323, %v352
      %v355 = vmul.f32 %v353, %v347
      %v356 = vmul.f32 %v353, %v348
      %v358 = vlaneseq
      %v359 = vshrl.u32 %v358, 7
      %v360 = vsub.s32 0, %v359
      %v361 = vrot.slane %v324, %v360
      %v363 = vadd.f32 %v355, %v361
      %v364 = vadd.f32 %v356, %v361
      %v365 = vpack.c.bf16 %v364, %v363
      %v366 = vld [vmem:[%s4] sm:$0xff]
      %v367 = vld [vmem:[%s4 + $0x8] sm:$0xf]
      %v368 = vld [vmem:[%s4 + $0xc] sm:$0xff]
      %v369 = vld [vmem:[%s4 + $0x14] sm:$0xf]
      %v370 = vld [vmem:[%s4 + $0x18] sm:$0xff]
      %v371 = vld [vmem:[%s4 + $0x20] sm:$0xf]
      %v372 = vld [vmem:[%s4 + $0x24] sm:$0xff]
      %v373 = vld [vmem:[%s4 + $0x2c] sm:$0xf]
      %v374 = vld [vmem:[%s4 + $0x30] sm:$0xff]
      %v375 = vld [vmem:[%s4 + $0x38] sm:$0xf]
      %v376 = vld [vmem:[%s4 + $0x3c] sm:$0xff]
      %v377 = vld [vmem:[%s4 + $0x44] sm:$0xf]
      %v378 = vld [vmem:[%s4 + $0x48] sm:$0xff]
      %v379 = vld [vmem:[%s4 + $0x50] sm:$0xf]
      %v380 = vld [vmem:[%s4 + $0x54] sm:$0xff]
      %v381 = vld [vmem:[%s4 + $0x5c] sm:$0xf]
      %v382 = vld [vmem:[%s4 + $0x60] sm:$0xff]
      %v383 = vld [vmem:[%s4 + $0x68] sm:$0xf]
      %v384 = vld [vmem:[%s4 + $0x6c] sm:$0xff]
      %v385 = vld [vmem:[%s4 + $0x74] sm:$0xf]
      %v386 = vld [vmem:[%s4 + $0x78] sm:$0xff]
      %v387 = vld [vmem:[%s4 + $0x80] sm:$0xf]
      %v388 = vld [vmem:[%s4 + $0x84] sm:$0xff]
      %v389 = vld [vmem:[%s4 + $0x8c] sm:$0xf]
      %v390 = vld [vmem:[%s4 + $0x90] sm:$0xff]
      %v391 = vld [vmem:[%s4 + $0x98] sm:$0xf]
      %v392 = vld [vmem:[%s4 + $0x9c] sm:$0xff]
      %v393 = vld [vmem:[%s4 + $0xa4] sm:$0xf]
      %v394 = vld [vmem:[%s4 + $0xa8] sm:$0xff]
      %v395 = vld [vmem:[%s4 + $0xb0] sm:$0xf]
      %v396 = vld [vmem:[%s4 + $0xb4] sm:$0xff]
      %v397 = vld [vmem:[%s4 + $0xbc] sm:$0xf]
      %v398 = vld [vmem:[%s5] sm:$0x7]
      %v400 = vlaneseq
      %v401 = vshrl.u32 %v400, 7
      %v402 = vsub.s32 0, %v401
      %v403 = vrot.slane %v398, %v402
      %v404 = vlaneseq
      %v405 = vshrl.u32 %v404, 7
      %v406 = vsub.s32 1, %v405
      %v407 = vrot.slane %v398, %v406
      %v408 = vlaneseq
      %v409 = vshrl.u32 %v408, 7
      %v410 = vsub.s32 2, %v409
      %v411 = vrot.slane %v398, %v410
      %v447 = vunpack.c.l.b16 %v366
      %v448 = vunpack.c.h.b16 %v366
      %v449 = vunpack.c.l.b16 %v367
      %v450 = vunpack.c.l.b16 %v368
      %v451 = vunpack.c.h.b16 %v368
      %v452 = vunpack.c.l.b16 %v369
      %v453 = vunpack.c.l.b16 %v370
      %v454 = vunpack.c.h.b16 %v370
      %v455 = vunpack.c.l.b16 %v371
      %v456 = vunpack.c.l.b16 %v372
      %v457 = vunpack.c.h.b16 %v372
      %v458 = vunpack.c.l.b16 %v373
      %v459 = vunpack.c.l.b16 %v374
      %v460 = vunpack.c.h.b16 %v374
      %v461 = vunpack.c.l.b16 %v375
      %v462 = vunpack.c.l.b16 %v376
      %v463 = vunpack.c.h.b16 %v376
      %v464 = vunpack.c.l.b16 %v377
      %v465 = vunpack.c.l.b16 %v378
      %v466 = vunpack.c.h.b16 %v378
      %v467 = vunpack.c.l.b16 %v379
      %v468 = vunpack.c.l.b16 %v380
      %v469 = vunpack.c.h.b16 %v380
      %v470 = vunpack.c.l.b16 %v381
      %v471 = vunpack.c.l.b16 %v382
      %v472 = vunpack.c.h.b16 %v382
      %v473 = vunpack.c.l.b16 %v383
      %v474 = vunpack.c.l.b16 %v384
      %v475 = vunpack.c.h.b16 %v384
      %v476 = vunpack.c.l.b16 %v385
      %v477 = vunpack.c.l.b16 %v386
      %v478 = vunpack.c.h.b16 %v386
      %v479 = vunpack.c.l.b16 %v387
      %v480 = vunpack.c.l.b16 %v388
      %v481 = vunpack.c.h.b16 %v388
      %v482 = vunpack.c.l.b16 %v389
      %v483 = vunpack.c.l.b16 %v390
      %v484 = vunpack.c.h.b16 %v390
      %v485 = vunpack.c.l.b16 %v391
      %v486 = vunpack.c.l.b16 %v392
      %v487 = vunpack.c.h.b16 %v392
      %v488 = vunpack.c.l.b16 %v393
      %v489 = vunpack.c.l.b16 %v394
      %v490 = vunpack.c.h.b16 %v394
      %v491 = vunpack.c.l.b16 %v395
      %v492 = vunpack.c.l.b16 %v396
      %v493 = vunpack.c.h.b16 %v396
      %v494 = vunpack.c.l.b16 %v397
      %v495 = vpack.c.b16 %v450, %v447
      %v496 = vpack.c.b16 %v451, %v448
      %v497 = vpack.c.b16 %v452, %v449
      %v498 = vpack.c.b16 %v456, %v453
      %v499 = vpack.c.b16 %v457, %v454
      %v500 = vpack.c.b16 %v458, %v455
      %v501 = vpack.c.b16 %v462, %v459
      %v502 = vpack.c.b16 %v463, %v460
      %v503 = vpack.c.b16 %v464, %v461
      %v504 = vpack.c.b16 %v468, %v465
      %v505 = vpack.c.b16 %v469, %v466
      %v506 = vpack.c.b16 %v470, %v467
      %v507 = vpack.c.b16 %v474, %v471
      %v508 = vpack.c.b16 %v475, %v472
      %v509 = vpack.c.b16 %v476, %v473
      %v510 = vpack.c.b16 %v480, %v477
      %v511 = vpack.c.b16 %v481, %v478
      %v512 = vpack.c.b16 %v482, %v479
      %v513 = vpack.c.b16 %v486, %v483
      %v514 = vpack.c.b16 %v487, %v484
      %v515 = vpack.c.b16 %v488, %v485
      %v516 = vpack.c.b16 %v492, %v489
      %v517 = vpack.c.b16 %v493, %v490
      %v518 = vpack.c.b16 %v494, %v491
      %543 = vmatprep.subr.bf16.mxu0 %v496
      %544 = vmatpush1.bf16.msra.mxu0 %v495
      %545 = vmatprep.subr.bf16.mxu0 %v499
      %546 = vmatpush1.bf16.msra.mxu0 %v498
      %547 = vmatprep.subr.bf16.mxu0 %v502
      %548 = vmatpush1.bf16.msra.mxu0 %v501
      %549 = vmatprep.subr.bf16.mxu0 %v505
      %550 = vmatpush1.bf16.msra.mxu0 %v504
      %551 = vmatprep.subr.bf16.mxu0 %v508
      %552 = vmatpush1.bf16.msra.mxu0 %v507
      %553 = vmatprep.subr.bf16.mxu0 %v511
      %554 = vmatpush1.bf16.msra.mxu0 %v510
      %555 = vmatprep.subr.bf16.mxu0 %v514
      %556 = vmatpush1.bf16.msra.mxu0 %v513
      %557 = vmatprep.subr.bf16.mxu0 %v517
      %558 = vmatpush1.bf16.msra.mxu0 %v516
      %559 = vmatprep.subr.bf16.mxu0 0
      %560 = vmatpush1.bf16.msra.mxu0 0
      %561 = vmatprep.subr.bf16.mxu0 0
      %562 = vmatpush1.bf16.msra.mxu0 0
      %563 = vmatprep.subr.bf16.mxu0 0
      %564 = vmatpush1.bf16.msra.mxu0 0
      %565 = vmatprep.subr.bf16.mxu0 0
      %566 = vmatpush1.bf16.msra.mxu0 0
      %567 = vmatprep.subr.bf16.mxu0 0
      %568 = vmatpush1.bf16.msra.mxu0 0
      %569 = vmatprep.subr.bf16.mxu0 0
      %570 = vmatpush1.bf16.msra.mxu0 0
      %571 = vmatprep.subr.bf16.mxu0 0
      %572 = vmatpush1.bf16.msra.mxu0 0
      %573 = vmatprep.subr.bf16.mxu0 0
      %574 = vmatpush1.bf16.msra.mxu0 0
      %575 = vmatprep.mubr.bf16.mxu0 0
      %576 = vmatmul.mubr.bf16.gmra.mrb[0].mxu0 %v365
      %v577 = vpop.f32.mrb[0].mxu0
      %v578 = vadd.f32 %v403, %v577
      %v579 = vpop.f32.mrb[0].mxu0
      %v580 = vadd.f32 %v407, %v579
      %v581 = vpop.f32.mrb[0].mxu0
      %v582 = vadd.f32 %v403, %v581
      %v583 = vpop.f32.mrb[0].mxu0
      %v584 = vadd.f32 %v407, %v583
      %585 = vdwg.mxu0
      %586 = vmatprep.subr.bf16.mxu0 0
      %587 = vmatpush1.bf16.msra.mxu0 %v497
      %588 = vmatprep.subr.bf16.mxu0 0
      %589 = vmatpush1.bf16.msra.mxu0 %v500
      %590 = vmatprep.subr.bf16.mxu0 0
      %591 = vmatpush1.bf16.msra.mxu0 %v503
      %592 = vmatprep.subr.bf16.mxu0 0
      %593 = vmatpush1.bf16.msra.mxu0 %v506
      %594 = vmatprep.subr.bf16.mxu0 0
      %595 = vmatpush1.bf16.msra.mxu0 %v509
      %596 = vmatprep.subr.bf16.mxu0 0
      %597 = vmatpush1.bf16.msra.mxu0 %v512
      %598 = vmatprep.subr.bf16.mxu0 0
      %599 = vmatpush1.bf16.msra.mxu0 %v515
      %600 = vmatprep.subr.bf16.mxu0 0
      %601 = vmatpush1.bf16.msra.mxu0 %v518
      %602 = vmatprep.subr.bf16.mxu0 0
      %603 = vmatpush1.bf16.msra.mxu0 0
      %604 = vmatprep.subr.bf16.mxu0 0
      %605 = vmatpush1.bf16.msra.mxu0 0
      %606 = vmatprep.subr.bf16.mxu0 0
      %607 = vmatpush1.bf16.msra.mxu0 0
      %608 = vmatprep.subr.bf16.mxu0 0
      %609 = vmatpush1.bf16.msra.mxu0 0
      %610 = vmatprep.subr.bf16.mxu0 0
      %611 = vmatpush1.bf16.msra.mxu0 0
      %612 = vmatprep.subr.bf16.mxu0 0
      %613 = vmatpush1.bf16.msra.mxu0 0
      %614 = vmatprep.subr.bf16.mxu0 0
      %615 = vmatpush1.bf16.msra.mxu0 0
      %616 = vmatprep.subr.bf16.mxu0 0
      %617 = vmatpush1.bf16.msra.mxu0 0
      %618 = vmatprep.mubr.bf16.mxu0 0
      %619 = vmatmul.mubr.bf16.gmra.mrb[0].mxu0 %v365
      %v620 = vpop.f32.mrb[0].mxu0
      %v621 = vadd.f32 %v411, %v620
      %v622 = vpop.f32.mrb[0].mxu0
      %v623 = vpop.f32.mrb[0].mxu0
      %v624 = vadd.f32 %v411, %v623
      %v625 = vpop.f32.mrb[0].mxu0
      %626 = vdwg.mxu0
      %v627 = vld [vmem:[%s314] sm:$0x1]
      %vm628 = vcmp.eq.f32.partialorder %v627, 0.0
      %v629 = vld [vmem:[%s6] sm:$0xf]
      %v630 = vld [vmem:[%s6 + $0x4] sm:$0xf]
      %v631 = vld [vmem:[%s6 + $0x8] sm:$0xf]
      %v632 = vld [vmem:[%s6 + $0xc] sm:$0xf]
      %v633 = vld [vmem:[%s6 + $0x10] sm:$0xf]
      %v634 = vld [vmem:[%s6 + $0x14] sm:$0xf]
      %v635 = vld [vmem:[%s6 + $0x18] sm:$0xf]
      %v636 = vld [vmem:[%s6 + $0x1c] sm:$0xf]
      %v637 = vld [vmem:[%s6 + $0x20] sm:$0xf]
      %v638 = vld [vmem:[%s6 + $0x24] sm:$0xf]
      %v639 = vld [vmem:[%s6 + $0x28] sm:$0xf]
      %v640 = vld [vmem:[%s6 + $0x2c] sm:$0xf]
      %v641 = vld [vmem:[%s6 + $0x30] sm:$0xf]
      %v642 = vld [vmem:[%s6 + $0x34] sm:$0xf]
      %v643 = vld [vmem:[%s6 + $0x38] sm:$0xf]
      %v644 = vld [vmem:[%s6 + $0x3c] sm:$0xf]
      %v645 = vld [vmem:[%s7] sm:$0x1]
      %v647 = vlaneseq
      %v648 = vshrl.u32 %v647, 7
      %v649 = vsub.s32 0, %v648
      %v650 = vrot.slane %v645, %v649
      %v652 = vadd.f32 %v321, %v650
      %v653 = vadd.f32 %v322, %v650
      %v654 = vmul.f32 %v578, 0.17677669
      %v655 = vmul.f32 %v582, 0.17677669
      %v656 = vpack.c.bf16 %v655, %v654
      %v657 = vpack.c.bf16 %v584, %v580
      %v658 = vpack.c.bf16 %v624, %v621
      %vm659 = vcmask 261120
      %v661 = vsel %vm659, %v656, 0
      %v664 = vsel %vm659, %v657, 0
      %666 = vmatprep.subr.bf16.mxu0 0
      %667 = vmatpush1.bf16.xpose.msra.mxu0 %v664
      %668 = vmatprep.subr.bf16.mxu0 0
      %669 = vmatpush1.bf16.xpose.msra.mxu0 0
      %670 = vmatprep.subr.bf16.mxu0 0
      %671 = vmatpush1.bf16.xpose.msra.mxu0 0
      %672 = vmatprep.subr.bf16.mxu0 0
      %673 = vmatpush1.bf16.xpose.msra.mxu0 0
      %674 = vmatprep.subr.bf16.mxu0 0
      %675 = vmatpush1.bf16.xpose.msra.mxu0 0
      %676 = vmatprep.subr.bf16.mxu0 0
      %677 = vmatpush1.bf16.xpose.msra.mxu0 0
      %678 = vmatprep.subr.bf16.mxu0 0
      %679 = vmatpush1.bf16.xpose.msra.mxu0 0
      %680 = vmatprep.subr.bf16.mxu0 0
      %681 = vmatpush1.bf16.xpose.msra.mxu0 0
      %682 = vmatprep.subr.bf16.mxu0 0
      %683 = vmatpush1.bf16.xpose.msra.mxu0 0
      %684 = vmatprep.subr.bf16.mxu0 0
      %685 = vmatpush1.bf16.xpose.msra.mxu0 0
      %686 = vmatprep.subr.bf16.mxu0 0
      %687 = vmatpush1.bf16.xpose.msra.mxu0 0
      %688 = vmatprep.subr.bf16.mxu0 0
      %689 = vmatpush1.bf16.xpose.msra.mxu0 0
      %690 = vmatprep.subr.bf16.mxu0 0
      %691 = vmatpush1.bf16.xpose.msra.mxu0 0
      %692 = vmatprep.subr.bf16.mxu0 0
      %693 = vmatpush1.bf16.xpose.msra.mxu0 0
      %694 = vmatprep.subr.bf16.mxu0 0
      %695 = vmatpush1.bf16.xpose.msra.mxu0 0
      %696 = vmatprep.subr.bf16.mxu0 0
      %697 = vmatpush1.bf16.xpose.msra.mxu0 0
      %698 = vmatprep.mubr.bf16.mxu0 0
      %699 = vmatmul.mubr.bf16.gmra.mrb[0].mxu0 %v661
      %v700 = vpop.f32.mrb[0].mxu0
      %v701 = vadd.f32 0.0, %v700
      %v702 = vpop.f32.mrb[0].mxu0
      %v703 = vpop.f32.mrb[0].mxu0
      %v704 = vadd.f32 0.0, %v703
      %v705 = vpop.f32.mrb[0].mxu0
      %706 = vdwg.mxu0
      %v707 = vsel %vm628, 1, 0
      %v708 = vlaneseq
      %v709 = vshrl.u32 %v708, 7
      %v710 = vsub.s32 0, %v709
      %v711 = vrot.slane %v707, %v710
      %vm712 = vcmp.eq.s32.totalorder %v711, 1
      %v713 = vsel %vm712, -1e+09, %v701
      %v714 = vsel %vm712, -1e+09, %v704
      %vm715 = vcmask 130048
      %v716 = vsel %vm715, %v713, -inf
      %717 = vmax.xlane.f32.xlu0 %v716
      %v718 = vpop.xlane.xlu0 %717
      %v719 = vsel %vm715, %v714, -inf
      %720 = vmax.xlane.f32.xlu0 %v719
      %v721 = vpop.xlane.xlu0 %720
      %v722 = vsub.f32 %v713, %v718
      %v723 = vsub.f32 %v714, %v721
      %v724 = vmul.f32 %v722, 1.442695
      %v725 = vpow.pop %v724
      %v726 = vmul.f32 %v723, 1.442695
      %v727 = vpow.pop %v726
      %v728 = vsel %vm715, %v725, 0.0
      %729 = vadd.xlane.f32.xlu0 %v728
      %v730 = vpop.xlane.xlu0 %729
      %v731 = vsel %vm715, %v727, 0.0
      %732 = vadd.xlane.f32.xlu0 %v731
      %v733 = vpop.xlane.xlu0 %732
      %v734 = vrcp.pop %v730
      %v735 = vrcp.pop %v733
      %v736 = vmul.f32 %v725, %v734
      %v737 = vmul.f32 %v727, %v735
      %v738 = vpack.c.bf16 %v737, %v736
      %v740 = vsel %vm715, %v738, 0
      %742 = vmatprep.subr.bf16.mxu0 0
      %743 = vmatpush1.bf16.msra.mxu0 %v658
      %744 = vmatprep.subr.bf16.mxu0 0
      %745 = vmatpush1.bf16.msra.mxu0 0
      %746 = vmatprep.subr.bf16.mxu0 0
      %747 = vmatpush1.bf16.msra.mxu0 0
      %748 = vmatprep.subr.bf16.mxu0 0
      %749 = vmatpush1.bf16.msra.mxu0 0
      %750 = vmatprep.subr.bf16.mxu0 0
      %751 = vmatpush1.bf16.msra.mxu0 0
      %752 = vmatprep.subr.bf16.mxu0 0
      %753 = vmatpush1.bf16.msra.mxu0 0
      %754 = vmatprep.subr.bf16.mxu0 0
      %755 = vmatpush1.bf16.msra.mxu0 0
      %756 = vmatprep.subr.bf16.mxu0 0
      %757 = vmatpush1.bf16.msra.mxu0 0
      %758 = vmatprep.subr.bf16.mxu0 0
      %759 = vmatpush1.bf16.msra.mxu0 0
      %760 = vmatprep.subr.bf16.mxu0 0
      %761 = vmatpush1.bf16.msra.mxu0 0
      %762 = vmatprep.subr.bf16.mxu0 0
      %763 = vmatpush1.bf16.msra.mxu0 0
      %764 = vmatprep.subr.bf16.mxu0 0
      %765 = vmatpush1.bf16.msra.mxu0 0
      %766 = vmatprep.subr.bf16.mxu0 0
      %767 = vmatpush1.bf16.msra.mxu0 0
      %768 = vmatprep.subr.bf16.mxu0 0
      %769 = vmatpush1.bf16.msra.mxu0 0
      %770 = vmatprep.subr.bf16.mxu0 0
      %771 = vmatpush1.bf16.msra.mxu0 0
      %772 = vmatprep.subr.bf16.mxu0 0
      %773 = vmatpush1.bf16.msra.mxu0 0
      %774 = vmatprep.mubr.bf16.mxu0 0
      %775 = vmatmul.mubr.bf16.gmra.mrb[0].mxu0 %v740
      %v776 = vpop.f32.mrb[0].mxu0
      %v777 = vadd.f32 0.0, %v776
      %v778 = vpop.f32.mrb[0].mxu0
      %v779 = vpop.f32.mrb[0].mxu0
      %v780 = vadd.f32 0.0, %v779
      %v781 = vpop.f32.mrb[0].mxu0
      %782 = vdwg.mxu0
      %v783 = vpack.c.bf16 %v780, %v777
      %v788 = vunpack.c.l.b16 %v629
      %v789 = vunpack.c.l.b16 %v630
      %v790 = vunpack.c.l.b16 %v631
      %v791 = vunpack.c.l.b16 %v632
      %v792 = vpack.c.b16 %v789, %v788
      %v793 = vpack.c.b16 %v791, %v790
      %v797 = vsel %vm659, %v783, 0
      %799 = vmatprep.subr.bf16.mxu0 0
      %800 = vmatpush1.bf16.msra.mxu0 %v792
      %801 = vmatprep.subr.bf16.mxu0 0
      %802 = vmatpush1.bf16.msra.mxu0 %v793
      %803 = vmatprep.subr.bf16.mxu0 0
      %804 = vmatpush1.bf16.msra.mxu0 0
      %805 = vmatprep.subr.bf16.mxu0 0
      %806 = vmatpush1.bf16.msra.mxu0 0
      %807 = vmatprep.subr.bf16.mxu0 0
      %808 = vmatpush1.bf16.msra.mxu0 0
      %809 = vmatprep.subr.bf16.mxu0 0
      %810 = vmatpush1.bf16.msra.mxu0 0
      %811 = vmatprep.subr.bf16.mxu0 0
      %812 = vmatpush1.bf16.msra.mxu0 0
      %813 = vmatprep.subr.bf16.mxu0 0
      %814 = vmatpush1.bf16.msra.mxu0 0
      %815 = vmatprep.subr.bf16.mxu0 0
      %816 = vmatpush1.bf16.msra.mxu0 0
      %817 = vmatprep.subr.bf16.mxu0 0
      %818 = vmatpush1.bf16.msra.mxu0 0
      %819 = vmatprep.subr.bf16.mxu0 0
      %820 = vmatpush1.bf16.msra.mxu0 0
      %821 = vmatprep.subr.bf16.mxu0 0
      %822 = vmatpush1.bf16.msra.mxu0 0
      %823 = vmatprep.subr.bf16.mxu0 0
      %824 = vmatpush1.bf16.msra.mxu0 0
      %825 = vmatprep.subr.bf16.mxu0 0
      %826 = vmatpush1.bf16.msra.mxu0 0
      %827 = vmatprep.subr.bf16.mxu0 0
      %828 = vmatpush1.bf16.msra.mxu0 0
      %829 = vmatprep.subr.bf16.mxu0 0
      %830 = vmatpush1.bf16.msra.mxu0 0
      %831 = vmatprep.mubr.bf16.mxu0 0
      %832 = vmatmul.mubr.bf16.gmra.mrb[0].mxu0 %v797
      %v833 = vpop.f32.mrb[0].mxu0
      %v834 = vadd.f32 0.0, %v833
      %v835 = vpop.f32.mrb[0].mxu0
      %v836 = vpop.f32.mrb[0].mxu0
      %v837 = vadd.f32 0.0, %v836
      %v838 = vpop.f32.mrb[0].mxu0
      %839 = vdwg.mxu0
      %v840 = vadd.f32 %v652, %v834
      %v841 = vadd.f32 %v653, %v837
      %843 = vrot.lane.b32.xlu0 %v656, 96
      %v844 = vpop.permute.xlu0 %843
      %846 = vrot.lane.b32.xlu0 %v657, 96
      %v847 = vpop.permute.xlu0 %846
      %v849 = vsel %vm659, %v844, 0
      %v852 = vsel %vm659, %v847, 0
      %854 = vmatprep.subr.bf16.mxu0 0
      %855 = vmatpush1.bf16.xpose.msra.mxu0 %v852
      %856 = vmatprep.subr.bf16.mxu0 0
      %857 = vmatpush1.bf16.xpose.msra.mxu0 0
      %858 = vmatprep.subr.bf16.mxu0 0
      %859 = vmatpush1.bf16.xpose.msra.mxu0 0
      %860 = vmatprep.subr.bf16.mxu0 0
      %861 = vmatpush1.bf16.xpose.msra.mxu0 0
      %862 = vmatprep.subr.bf16.mxu0 0
      %863 = vmatpush1.bf16.xpose.msra.mxu0 0
      %864 = vmatprep.subr.bf16.mxu0 0
      %865 = vmatpush1.bf16.xpose.msra.mxu0 0
      %866 = vmatprep.subr.bf16.mxu0 0
      %867 = vmatpush1.bf16.xpose.msra.mxu0 0
      %868 = vmatprep.subr.bf16.mxu0 0
      %869 = vmatpush1.bf16.xpose.msra.mxu0 0
      %870 = vmatprep.subr.bf16.mxu0 0
      %871 = vmatpush1.bf16.xpose.msra.mxu0 0
      %872 = vmatprep.subr.bf16.mxu0 0
      %873 = vmatpush1.bf16.xpose.msra.mxu0 0
      %874 = vmatprep.subr.bf16.mxu0 0
      %875 = vmatpush1.bf16.xpose.msra.mxu0 0
      %876 = vmatprep.subr.bf16.mxu0 0
      %877 = vmatpush1.bf16.xpose.msra.mxu0 0
      %878 = vmatprep.subr.bf16.mxu0 0
      %879 = vmatpush1.bf16.xpose.msra.mxu0 0
      %880 = vmatprep.subr.bf16.mxu0 0
      %881 = vmatpush1.bf16.xpose.msra.mxu0 0
      %882 = vmatprep.subr.bf16.mxu0 0
      %883 = vmatpush1.bf16.xpose.msra.mxu0 0
      %884 = vmatprep.subr.bf16.mxu0 0
      %885 = vmatpush1.bf16.xpose.msra.mxu0 0
      %886 = vmatprep.mubr.bf16.mxu0 0
      %887 = vmatmul.mubr.bf16.gmra.mrb[0].mxu0 %v849
      %v888 = vpop.f32.mrb[0].mxu0
      %v889 = vadd.f32 0.0, %v888
      %v890 = vpop.f32.mrb[0].mxu0
      %v891 = vpop.f32.mrb[0].mxu0
      %v892 = vadd.f32 0.0, %v891
      %v893 = vpop.f32.mrb[0].mxu0
      %894 = vdwg.mxu0
      %v895 = vsel %vm712, -1e+09, %v889
      %v896 = vsel %vm712, -1e+09, %v892
      %v897 = vsel %vm715, %v895, -inf
      %898 = vmax.xlane.f32.xlu0 %v897
      %v899 = vpop.xlane.xlu0 %898
      %v900 = vsel %vm715, %v896, -inf
      %901 = vmax.xlane.f32.xlu0 %v900
      %v902 = vpop.xlane.xlu0 %901
      %v903 = vsub.f32 %v895, %v899
      %v904 = vsub.f32 %v896, %v902
      %v905 = vmul.f32 %v903, 1.442695
      %v906 = vpow.pop %v905
      %v907 = vmul.f32 %v904, 1.442695
      %v908 = vpow.pop %v907
      %v909 = vsel %vm715, %v906, 0.0
      %910 = vadd.xlane.f32.xlu0 %v909
      %v911 = vpop.xlane.xlu0 %910
      %v912 = vsel %vm715, %v908, 0.0
      %913 = vadd.xlane.f32.xlu0 %v912
      %v914 = vpop.xlane.xlu0 %913
      %v915 = vrcp.pop %v911
      %v916 = vrcp.pop %v914
      %v917 = vmul.f32 %v906, %v915
      %v918 = vmul.f32 %v908, %v916
      %v919 = vpack.c.bf16 %v918, %v917
      %921 = vrot.lane.b32.xlu0 %v658, 96
      %v922 = vpop.permute.xlu0 %921
      %v925 = vsel %vm715, %v919, 0
      %927 = vmatprep.subr.bf16.mxu0 0
      %928 = vmatpush1.bf16.msra.mxu0 %v922
      %929 = vmatprep.subr.bf16.mxu0 0
      %930 = vmatpush1.bf16.msra.mxu0 0
      %931 = vmatprep.subr.bf16.mxu0 0
      %932 = vmatpush1.bf16.msra.mxu0 0
      %933 = vmatprep.subr.bf16.mxu0 0
      %934 = vmatpush1.bf16.msra.mxu0 0
      %935 = vmatprep.subr.bf16.mxu0 0
      %936 = vmatpush1.bf16.msra.mxu0 0
      %937 = vmatprep.subr.bf16.mxu0 0
      %938 = vmatpush1.bf16.msra.mxu0 0
      %939 = vmatprep.subr.bf16.mxu0 0
      %940 = vmatpush1.bf16.msra.mxu0 0
      %941 = vmatprep.subr.bf16.mxu0 0
      %942 = vmatpush1.bf16.msra.mxu0 0
      %943 = vmatprep.subr.bf16.mxu0 0
      %944 = vmatpush1.bf16.msra.mxu0 0
      %945 = vmatprep.subr.bf16.mxu0 0
      %946 = vmatpush1.bf16.msra.mxu0 0
      %947 = vmatprep.subr.bf16.mxu0 0
      %948 = vmatpush1.bf16.msra.mxu0 0
      %949 = vmatprep.subr.bf16.mxu0 0
      %950 = vmatpush1.bf16.msra.mxu0 0
      %951 = vmatprep.subr.bf16.mxu0 0
      %952 = vmatpush1.bf16.msra.mxu0 0
      %953 = vmatprep.subr.bf16.mxu0 0
      %954 = vmatpush1.bf16.msra.mxu0 0
      %955 = vmatprep.subr.bf16.mxu0 0
      %956 = vmatpush1.bf16.msra.mxu0 0
      %957 = vmatprep.subr.bf16.mxu0 0
      %958 = vmatpush1.bf16.msra.mxu0 0
      %959 = vmatprep.mubr.bf16.mxu0 0
      %960 = vmatmul.mubr.bf16.gmra.mrb[0].mxu0 %v925
      %v961 = vpop.f32.mrb[0].mxu0
      %v962 = vadd.f32 0.0, %v961
      %v963 = vpop.f32.mrb[0].mxu0
      %v964 = vpop.f32.mrb[0].mxu0
      %v965 = vadd.f32 0.0, %v964
      %v966 = vpop.f32.mrb[0].mxu0
      %967 = vdwg.mxu0
      %v968 = vpack.c.bf16 %v965, %v962
      %v973 = vunpack.c.l.b16 %v633
      %v974 = vunpack.c.l.b16 %v634
      %v975 = vunpack.c.l.b16 %v635
      %v976 = vunpack.c.l.b16 %v636
      %v977 = vpack.c.b16 %v974, %v973
      %v978 = vpack.c.b16 %v976, %v975
      %v982 = vsel %vm659, %v968, 0
      %984 = vmatprep.subr.bf16.mxu0 0
      %985 = vmatpush1.bf16.msra.mxu0 %v977
      %986 = vmatprep.subr.bf16.mxu0 0
      %987 = vmatpush1.bf16.msra.mxu0 %v978
      %988 = vmatprep.subr.bf16.mxu0 0
      %989 = vmatpush1.bf16.msra.mxu0 0
      %990 = vmatprep.subr.bf16.mxu0 0
      %991 = vmatpush1.bf16.msra.mxu0 0
      %992 = vmatprep.subr.bf16.mxu0 0
      %993 = vmatpush1.bf16.msra.mxu0 0
      %994 = vmatprep.subr.bf16.mxu0 0
      %995 = vmatpush1.bf16.msra.mxu0 0
      %996 = vmatprep.subr.bf16.mxu0 0
      %997 = vmatpush1.bf16.msra.mxu0 0
      %998 = vmatprep.subr.bf16.mxu0 0
      %999 = vmatpush1.bf16.msra.mxu0 0
      %1000 = vmatprep.subr.bf16.mxu0 0
      %1001 = vmatpush1.bf16.msra.mxu0 0
      %1002 = vmatprep.subr.bf16.mxu0 0
      %1003 = vmatpush1.bf16.msra.mxu0 0
      %1004 = vmatprep.subr.bf16.mxu0 0
      %1005 = vmatpush1.bf16.msra.mxu0 0
      %1006 = vmatprep.subr.bf16.mxu0 0
      %1007 = vmatpush1.bf16.msra.mxu0 0
      %1008 = vmatprep.subr.bf16.mxu0 0
      %1009 = vmatpush1.bf16.msra.mxu0 0
      %1010 = vmatprep.subr.bf16.mxu0 0
      %1011 = vmatpush1.bf16.msra.mxu0 0
      %1012 = vmatprep.subr.bf16.mxu0 0
      %1013 = vmatpush1.bf16.msra.mxu0 0
      %1014 = vmatprep.subr.bf16.mxu0 0
      %1015 = vmatpush1.bf16.msra.mxu0 0
      %1016 = vmatprep.mubr.bf16.mxu0 0
      %1017 = vmatmul.mubr.bf16.gmra.mrb[0].mxu0 %v982
      %v1018 = vpop.f32.mrb[0].mxu0
      %v1019 = vadd.f32 0.0, %v1018
      %v1020 = vpop.f32.mrb[0].mxu0
      %v1021 = vpop.f32.mrb[0].mxu0
      %v1022 = vadd.f32 0.0, %v1021
      %v1023 = vpop.f32.mrb[0].mxu0
      %1024 = vdwg.mxu0
      %v1025 = vadd.f32 %v840, %v1019
      %v1026 = vadd.f32 %v841, %v1022
      %1027 = vrot.lane.b32.xlu0 %v656, 64
      %v1028 = vpop.permute.xlu0 %1027
      %1029 = vrot.lane.b32.xlu0 %v657, 64
      %v1030 = vpop.permute.xlu0 %1029
      %v1032 = vsel %vm659, %v1028, 0
      %v1035 = vsel %vm659, %v1030, 0
      %1037 = vmatprep.subr.bf16.mxu0 0
      %1038 = vmatpush1.bf16.xpose.msra.mxu0 %v1035
      %1039 = vmatprep.subr.bf16.mxu0 0
      %1040 = vmatpush1.bf16.xpose.msra.mxu0 0
      %1041 = vmatprep.subr.bf16.mxu0 0
      %1042 = vmatpush1.bf16.xpose.msra.mxu0 0
      %1043 = vmatprep.subr.bf16.mxu0 0
      %1044 = vmatpush1.bf16.xpose.msra.mxu0 0
      %1045 = vmatprep.subr.bf16.mxu0 0
      %1046 = vmatpush1.bf16.xpose.msra.mxu0 0
      %1047 = vmatprep.subr.bf16.mxu0 0
      %1048 = vmatpush1.bf16.xpose.msra.mxu0 0
      %1049 = vmatprep.subr.bf16.mxu0 0
      %1050 = vmatpush1.bf16.xpose.msra.mxu0 0
      %1051 = vmatprep.subr.bf16.mxu0 0
      %1052 = vmatpush1.bf16.xpose.msra.mxu0 0
      %1053 = vmatprep.subr.bf16.mxu0 0
      %1054 = vmatpush1.bf16.xpose.msra.mxu0 0
      %1055 = vmatprep.subr.bf16.mxu0 0
      %1056 = vmatpush1.bf16.xpose.msra.mxu0 0
      %1057 = vmatprep.subr.bf16.mxu0 0
      %1058 = vmatpush1.bf16.xpose.msra.mxu0 0
      %1059 = vmatprep.subr.bf16.mxu0 0
      %1060 = vmatpush1.bf16.xpose.msra.mxu0 0
      %1061 = vmatprep.subr.bf16.mxu0 0
      %1062 = vmatpush1.bf16.xpose.msra.mxu0 0
      %1063 = vmatprep.subr.bf16.mxu0 0
      %1064 = vmatpush1.bf16.xpose.msra.mxu0 0
      %1065 = vmatprep.subr.bf16.mxu0 0
      %1066 = vmatpush1.bf16.xpose.msra.mxu0 0
      %1067 = vmatprep.subr.bf16.mxu0 0
      %1068 = vmatpush1.bf16.xpose.msra.mxu0 0
      %1069 = vmatprep.mubr.bf16.mxu0 0
      %1070 = vmatmul.mubr.bf16.gmra.mrb[0].mxu0 %v1032
      %v1071 = vpop.f32.mrb[0].mxu0
      %v1072 = vadd.f32 0.0, %v1071
      %v1073 = vpop.f32.mrb[0].mxu0
      %v1074 = vpop.f32.mrb[0].mxu0
      %v1075 = vadd.f32 0.0, %v1074
      %v1076 = vpop.f32.mrb[0].mxu0
      %1077 = vdwg.mxu0
      %v1078 = vsel %vm712, -1e+09, %v1072
      %v1079 = vsel %vm712, -1e+09, %v1075
      %v1080 = vsel %vm715, %v1078, -inf
      %1081 = vmax.xlane.f32.xlu0 %v1080
      %v1082 = vpop.xlane.xlu0 %1081
      %v1083 = vsel %vm715, %v1079, -inf
      %1084 = vmax.xlane.f32.xlu0 %v1083
      %v1085 = vpop.xlane.xlu0 %1084
      %v1086 = vsub.f32 %v1078, %v1082
      %v1087 = vsub.f32 %v1079, %v1085
      %v1088 = vmul.f32 %v1086, 1.442695
      %v1089 = vpow.pop %v1088
      %v1090 = vmul.f32 %v1087, 1.442695
      %v1091 = vpow.pop %v1090
      %v1092 = vsel %vm715, %v1089, 0.0
      %1093 = vadd.xlane.f32.xlu0 %v1092
      %v1094 = vpop.xlane.xlu0 %1093
      %v1095 = vsel %vm715, %v1091, 0.0
      %1096 = vadd.xlane.f32.xlu0 %v1095
      %v1097 = vpop.xlane.xlu0 %1096
      %v1098 = vrcp.pop %v1094
      %v1099 = vrcp.pop %v1097
      %v1100 = vmul.f32 %v1089, %v1098
      %v1101 = vmul.f32 %v1091, %v1099
      %v1102 = vpack.c.bf16 %v1101, %v1100
      %1103 = vrot.lane.b32.xlu0 %v658, 64
      %v1104 = vpop.permute.xlu0 %1103
      %v1107 = vsel %vm715, %v1102, 0
      %1109 = vmatprep.subr.bf16.mxu0 0
      %1110 = vmatpush1.bf16.msra.mxu0 %v1104
      %1111 = vmatprep.subr.bf16.mxu0 0
      %1112 = vmatpush1.bf16.msra.mxu0 0
      %1113 = vmatprep.subr.bf16.mxu0 0
      %1114 = vmatpush1.bf16.msra.mxu0 0
      %1115 = vmatprep.subr.bf16.mxu0 0
      %1116 = vmatpush1.bf16.msra.mxu0 0
      %1117 = vmatprep.subr.bf16.mxu0 0
      %1118 = vmatpush1.bf16.msra.mxu0 0
      %1119 = vmatprep.subr.bf16.mxu0 0
      %1120 = vmatpush1.bf16.msra.mxu0 0
      %1121 = vmatprep.subr.bf16.mxu0 0
      %1122 = vmatpush1.bf16.msra.mxu0 0
      %1123 = vmatprep.subr.bf16.mxu0 0
      %1124 = vmatpush1.bf16.msra.mxu0 0
      %1125 = vmatprep.subr.bf16.mxu0 0
      %1126 = vmatpush1.bf16.msra.mxu0 0
      %1127 = vmatprep.subr.bf16.mxu0 0
      %1128 = vmatpush1.bf16.msra.mxu0 0
      %1129 = vmatprep.subr.bf16.mxu0 0
      %1130 = vmatpush1.bf16.msra.mxu0 0
      %1131 = vmatprep.subr.bf16.mxu0 0
      %1132 = vmatpush1.bf16.msra.mxu0 0
      %1133 = vmatprep.subr.bf16.mxu0 0
      %1134 = vmatpush1.bf16.msra.mxu0 0
      %1135 = vmatprep.subr.bf16.mxu0 0
      %1136 = vmatpush1.bf16.msra.mxu0 0
      %1137 = vmatprep.subr.bf16.mxu0 0
      %1138 = vmatpush1.bf16.msra.mxu0 0
      %1139 = vmatprep.subr.bf16.mxu0 0
      %1140 = vmatpush1.bf16.msra.mxu0 0
      %1141 = vmatprep.mubr.bf16.mxu0 0
      %1142 = vmatmul.mubr.bf16.gmra.mrb[0].mxu0 %v1107
      %v1143 = vpop.f32.mrb[0].mxu0
      %v1144 = vadd.f32 0.0, %v1143
      %v1145 = vpop.f32.mrb[0].mxu0
      %v1146 = vpop.f32.mrb[0].mxu0
      %v1147 = vadd.f32 0.0, %v1146
      %v1148 = vpop.f32.mrb[0].mxu0
      %1149 = vdwg.mxu0
      %v1150 = vpack.c.bf16 %v1147, %v1144
      %v1155 = vunpack.c.l.b16 %v637
      %v1156 = vunpack.c.l.b16 %v638
      %v1157 = vunpack.c.l.b16 %v639
      %v1158 = vunpack.c.l.b16 %v640
      %v1159 = vpack.c.b16 %v1156, %v1155
      %v1160 = vpack.c.b16 %v1158, %v1157
      %v1164 = vsel %vm659, %v1150, 0
      %1166 = vmatprep.subr.bf16.mxu0 0
      %1167 = vmatpush1.bf16.msra.mxu0 %v1159
      %1168 = vmatprep.subr.bf16.mxu0 0
      %1169 = vmatpush1.bf16.msra.mxu0 %v1160
      %1170 = vmatprep.subr.bf16.mxu0 0
      %1171 = vmatpush1.bf16.msra.mxu0 0
      %1172 = vmatprep.subr.bf16.mxu0 0
      %1173 = vmatpush1.bf16.msra.mxu0 0
      %1174 = vmatprep.subr.bf16.mxu0 0
      %1175 = vmatpush1.bf16.msra.mxu0 0
      %1176 = vmatprep.subr.bf16.mxu0 0
      %1177 = vmatpush1.bf16.msra.mxu0 0
      %1178 = vmatprep.subr.bf16.mxu0 0
      %1179 = vmatpush1.bf16.msra.mxu0 0
      %1180 = vmatprep.subr.bf16.mxu0 0
      %1181 = vmatpush1.bf16.msra.mxu0 0
      %1182 = vmatprep.subr.bf16.mxu0 0
      %1183 = vmatpush1.bf16.msra.mxu0 0
      %1184 = vmatprep.subr.bf16.mxu0 0
      %1185 = vmatpush1.bf16.msra.mxu0 0
      %1186 = vmatprep.subr.bf16.mxu0 0
      %1187 = vmatpush1.bf16.msra.mxu0 0
      %1188 = vmatprep.subr.bf16.mxu0 0
      %1189 = vmatpush1.bf16.msra.mxu0 0
      %1190 = vmatprep.subr.bf16.mxu0 0
      %1191 = vmatpush1.bf16.msra.mxu0 0
      %1192 = vmatprep.subr.bf16.mxu0 0
      %1193 = vmatpush1.bf16.msra.mxu0 0
      %1194 = vmatprep.subr.bf16.mxu0 0
      %1195 = vmatpush1.bf16.msra.mxu0 0
      %1196 = vmatprep.subr.bf16.mxu0 0
      %1197 = vmatpush1.bf16.msra.mxu0 0
      %1198 = vmatprep.mubr.bf16.mxu0 0
      %1199 = vmatmul.mubr.bf16.gmra.mrb[0].mxu0 %v1164
      %v1200 = vpop.f32.mrb[0].mxu0
      %v1201 = vadd.f32 0.0, %v1200
      %v1202 = vpop.f32.mrb[0].mxu0
      %v1203 = vpop.f32.mrb[0].mxu0
      %v1204 = vadd.f32 0.0, %v1203
      %v1205 = vpop.f32.mrb[0].mxu0
      %1206 = vdwg.mxu0
      %v1207 = vadd.f32 %v1025, %v1201
      %v1208 = vadd.f32 %v1026, %v1204
      %1209 = vrot.lane.b32.xlu0 %v656, 32
      %v1210 = vpop.permute.xlu0 %1209
      %1211 = vrot.lane.b32.xlu0 %v657, 32
      %v1212 = vpop.permute.xlu0 %1211
      %v1214 = vsel %vm659, %v1210, 0
      %v1217 = vsel %vm659, %v1212, 0
      %1219 = vmatprep.subr.bf16.mxu0 0
      %1220 = vmatpush1.bf16.xpose.msra.mxu0 %v1217
      %1221 = vmatprep.subr.bf16.mxu0 0
      %1222 = vmatpush1.bf16.xpose.msra.mxu0 0
      %1223 = vmatprep.subr.bf16.mxu0 0
      %1224 = vmatpush1.bf16.xpose.msra.mxu0 0
      %1225 = vmatprep.subr.bf16.mxu0 0
      %1226 = vmatpush1.bf16.xpose.msra.mxu0 0
      %1227 = vmatprep.subr.bf16.mxu0 0
      %1228 = vmatpush1.bf16.xpose.msra.mxu0 0
      %1229 = vmatprep.subr.bf16.mxu0 0
      %1230 = vmatpush1.bf16.xpose.msra.mxu0 0
      %1231 = vmatprep.subr.bf16.mxu0 0
      %1232 = vmatpush1.bf16.xpose.msra.mxu0 0
      %1233 = vmatprep.subr.bf16.mxu0 0
      %1234 = vmatpush1.bf16.xpose.msra.mxu0 0
      %1235 = vmatprep.subr.bf16.mxu0 0
      %1236 = vmatpush1.bf16.xpose.msra.mxu0 0
      %1237 = vmatprep.subr.bf16.mxu0 0
      %1238 = vmatpush1.bf16.xpose.msra.mxu0 0
      %1239 = vmatprep.subr.bf16.mxu0 0
      %1240 = vmatpush1.bf16.xpose.msra.mxu0 0
      %1241 = vmatprep.subr.bf16.mxu0 0
      %1242 = vmatpush1.bf16.xpose.msra.mxu0 0
      %1243 = vmatprep.subr.bf16.mxu0 0
      %1244 = vmatpush1.bf16.xpose.msra.mxu0 0
      %1245 = vmatprep.subr.bf16.mxu0 0
      %1246 = vmatpush1.bf16.xpose.msra.mxu0 0
      %1247 = vmatprep.subr.bf16.mxu0 0
      %1248 = vmatpush1.bf16.xpose.msra.mxu0 0
      %1249 = vmatprep.subr.bf16.mxu0 0
      %1250 = vmatpush1.bf16.xpose.msra.mxu0 0
      %1251 = vmatprep.mubr.bf16.mxu0 0
      %1252 = vmatmul.mubr.bf16.gmra.mrb[0].mxu0 %v1214
      %v1253 = vpop.f32.mrb[0].mxu0
      %v1254 = vadd.f32 0.0, %v1253
      %v1255 = vpop.f32.mrb[0].mxu0
      %v1256 = vpop.f32.mrb[0].mxu0
      %v1257 = vadd.f32 0.0, %v1256
      %v1258 = vpop.f32.mrb[0].mxu0
      %1259 = vdwg.mxu0
      %v1260 = vsel %vm712, -1e+09, %v1254
      %v1261 = vsel %vm712, -1e+09, %v1257
      %v1262 = vsel %vm715, %v1260, -inf
      %1263 = vmax.xlane.f32.xlu0 %v1262
      %v1264 = vpop.xlane.xlu0 %1263
      %v1265 = vsel %vm715, %v1261, -inf
      %1266 = vmax.xlane.f32.xlu0 %v1265
      %v1267 = vpop.xlane.xlu0 %1266
      %v1268 = vsub.f32 %v1260, %v1264
      %v1269 = vsub.f32 %v1261, %v1267
      %v1270 = vmul.f32 %v1268, 1.442695
      %v1271 = vpow.pop %v1270
      %v1272 = vmul.f32 %v1269, 1.442695
      %v1273 = vpow.pop %v1272
      %v1274 = vsel %vm715, %v1271, 0.0
      %1275 = vadd.xlane.f32.xlu0 %v1274
      %v1276 = vpop.xlane.xlu0 %1275
      %v1277 = vsel %vm715, %v1273, 0.0
      %1278 = vadd.xlane.f32.xlu0 %v1277
      %v1279 = vpop.xlane.xlu0 %1278
      %v1280 = vrcp.pop %v1276
      %v1281 = vrcp.pop %v1279
      %v1282 = vmul.f32 %v1271, %v1280
      %v1283 = vmul.f32 %v1273, %v1281
      %v1284 = vpack.c.bf16 %v1283, %v1282
      %1285 = vrot.lane.b32.xlu0 %v658, 32
      %v1286 = vpop.permute.xlu0 %1285
      %v1289 = vsel %vm715, %v1284, 0
      %1291 = vmatprep.subr.bf16.mxu0 0
      %1292 = vmatpush1.bf16.msra.mxu0 %v1286
      %1293 = vmatprep.subr.bf16.mxu0 0
      %1294 = vmatpush1.bf16.msra.mxu0 0
      %1295 = vmatprep.subr.bf16.mxu0 0
      %1296 = vmatpush1.bf16.msra.mxu0 0
      %1297 = vmatprep.subr.bf16.mxu0 0
      %1298 = vmatpush1.bf16.msra.mxu0 0
      %1299 = vmatprep.subr.bf16.mxu0 0
      %1300 = vmatpush1.bf16.msra.mxu0 0
      %1301 = vmatprep.subr.bf16.mxu0 0
      %1302 = vmatpush1.bf16.msra.mxu0 0
      %1303 = vmatprep.subr.bf16.mxu0 0
      %1304 = vmatpush1.bf16.msra.mxu0 0
      %1305 = vmatprep.subr.bf16.mxu0 0
      %1306 = vmatpush1.bf16.msra.mxu0 0
      %1307 = vmatprep.subr.bf16.mxu0 0
      %1308 = vmatpush1.bf16.msra.mxu0 0
      %1309 = vmatprep.subr.bf16.mxu0 0
      %1310 = vmatpush1.bf16.msra.mxu0 0
      %1311 = vmatprep.subr.bf16.mxu0 0
      %1312 = vmatpush1.bf16.msra.mxu0 0
      %1313 = vmatprep.subr.bf16.mxu0 0
      %1314 = vmatpush1.bf16.msra.mxu0 0
      %1315 = vmatprep.subr.bf16.mxu0 0
      %1316 = vmatpush1.bf16.msra.mxu0 0
      %1317 = vmatprep.subr.bf16.mxu0 0
      %1318 = vmatpush1.bf16.msra.mxu0 0
      %1319 = vmatprep.subr.bf16.mxu0 0
      %1320 = vmatpush1.bf16.msra.mxu0 0
      %1321 = vmatprep.subr.bf16.mxu0 0
      %1322 = vmatpush1.bf16.msra.mxu0 0
      %1323 = vmatprep.mubr.bf16.mxu0 0
      %1324 = vmatmul.mubr.bf16.gmra.mrb[0].mxu0 %v1289
      %v1325 = vpop.f32.mrb[0].mxu0
      %v1326 = vadd.f32 0.0, %v1325
      %v1327 = vpop.f32.mrb[0].mxu0
      %v1328 = vpop.f32.mrb[0].mxu0
      %v1329 = vadd.f32 0.0, %v1328
      %v1330 = vpop.f32.mrb[0].mxu0
      %1331 = vdwg.mxu0
      %v1332 = vpack.c.bf16 %v1329, %v1326
      %v1337 = vunpack.c.l.b16 %v641
      %v1338 = vunpack.c.l.b16 %v642
      %v1339 = vunpack.c.l.b16 %v643
      %v1340 = vunpack.c.l.b16 %v644
      %v1341 = vpack.c.b16 %v1338, %v1337
      %v1342 = vpack.c.b16 %v1340, %v1339
      %v1346 = vsel %vm659, %v1332, 0
      %1348 = vmatprep.subr.bf16.mxu0 0
      %1349 = vmatpush1.bf16.msra.mxu0 %v1341
      %1350 = vmatprep.subr.bf16.mxu0 0
      %1351 = vmatpush1.bf16.msra.mxu0 %v1342
      %1352 = vmatprep.subr.bf16.mxu0 0
      %1353 = vmatpush1.bf16.msra.mxu0 0
      %1354 = vmatprep.subr.bf16.mxu0 0
      %1355 = vmatpush1.bf16.msra.mxu0 0
      %1356 = vmatprep.subr.bf16.mxu0 0
      %1357 = vmatpush1.bf16.msra.mxu0 0
      %1358 = vmatprep.subr.bf16.mxu0 0
      %1359 = vmatpush1.bf16.msra.mxu0 0
      %1360 = vmatprep.subr.bf16.mxu0 0
      %1361 = vmatpush1.bf16.msra.mxu0 0
      %1362 = vmatprep.subr.bf16.mxu0 0
      %1363 = vmatpush1.bf16.msra.mxu0 0
      %1364 = vmatprep.subr.bf16.mxu0 0
      %1365 = vmatpush1.bf16.msra.mxu0 0
      %1366 = vmatprep.subr.bf16.mxu0 0
      %1367 = vmatpush1.bf16.msra.mxu0 0
      %1368 = vmatprep.subr.bf16.mxu0 0
      %1369 = vmatpush1.bf16.msra.mxu0 0
      %1370 = vmatprep.subr.bf16.mxu0 0
      %1371 = vmatpush1.bf16.msra.mxu0 0
      %1372 = vmatprep.subr.bf16.mxu0 0
      %1373 = vmatpush1.bf16.msra.mxu0 0
      %1374 = vmatprep.subr.bf16.mxu0 0
      %1375 = vmatpush1.bf16.msra.mxu0 0
      %1376 = vmatprep.subr.bf16.mxu0 0
      %1377 = vmatpush1.bf16.msra.mxu0 0
      %1378 = vmatprep.subr.bf16.mxu0 0
      %1379 = vmatpush1.bf16.msra.mxu0 0
      %1380 = vmatprep.mubr.bf16.mxu0 0
      %1381 = vmatmul.mubr.bf16.gmra.mrb[0].mxu0 %v1346
      %v1382 = vpop.f32.mrb[0].mxu0
      %v1383 = vadd.f32 0.0, %v1382
      %v1384 = vpop.f32.mrb[0].mxu0
      %v1385 = vpop.f32.mrb[0].mxu0
      %v1386 = vadd.f32 0.0, %v1385
      %v1387 = vpop.f32.mrb[0].mxu0
      %1388 = vdwg.mxu0
      %v1389 = vadd.f32 %v1207, %v1383
      %v1390 = vadd.f32 %v1208, %v1386
      %1391 = vst [vmem:[%s319] sm:$0xff] %v1389
      %1392 = vst [vmem:[%s319 + $0x8] sm:$0xff] %v1390
      %p1393 = scmp.lt.s32.totalorder %s19, 1
      %s1394 = scalar_select %p1393, %s19, 1
      %s1395 = smul.addr %s1394, 2
      %s1396 = smul.addr %s1395, 8
      %s1397 = scalar_lea.vmem %s8, %s1396
      // Predicated region
      $region53: #{encoder_layer_forward.2} parent=51 // pred_check
        %p1398 = pneg %p215
      $region54: #{encoder_layer_forward.2} parent=51 // pred_check_branch
        %1400 = sbr.rel (%p1398) target = $region56
      $region55: #{encoder_layer_forward.2} parent=51 // pred_region
        _
      $region56: #{encoder_layer_forward.2} parent=51 // pred_fallthru
        _
    $region52: #{encoder_layer_forward.2} parent=5 // pred_fallthru
      _
    %p1401 = scmp.le.s32.totalorder 2, %s14
    // Predicated region
    $region57: #{encoder_layer_forward.2} parent=5 // pred_check
      %p1402 = pneg %p1401
    $region58: #{encoder_layer_forward.2} parent=5 // pred_check_branch
      %1404 = sbr.rel (%p1402) target = $region60
    $region59: #{encoder_layer_forward.2} parent=5 // pred_region
      %s1405 = ssub.s32 %s14, 2
      // Predicated region
      $region61: #{encoder_layer_forward.2} parent=59 // pred_check
        %p1406 = pneg %p221
      $region62: #{encoder_layer_forward.2} parent=59 // pred_check_branch
        %1408 = sbr.rel (%p1406) target = $region64
      $region63: #{encoder_layer_forward.2} parent=59 // pred_region
        %p1409 = scmp.lt.s32.totalorder %s20, 1
        %s1410 = scalar_select %p1409, %s20, 1
        %s1411 = smul.addr %s1410, 2
        %s1412 = smul.addr %s1411, 8
        %s1413 = scalar_lea.vmem %s8, %s1412
      $region64: #{encoder_layer_forward.2} parent=59 // pred_fallthru
        _
    $region60: #{encoder_layer_forward.2} parent=5 // pred_fallthru
      _
  $region6: #{encoder_layer_forward.2} parent=0 // loop_footer
    %s18 = sadd.s32 1, %s14
  $region7: #{encoder_layer_forward.2} parent=0 // loop_footer_branch
    %13 = sbr.rel target = $region3
  $region8: #{encoder_layer_forward.2} parent=0 // loop_exit
    _

</llo_original>
